<compile_context>
chip_gen: v6e
topology: v6e:2x2x1
jax: 0.10.0
libtpu: 0.0.40
codegen_flags: <defaults>
</compile_context>

<pallas_src>
import functools

import numpy as np
import jax
import jax.numpy as jnp
from jax import lax
from jax.experimental import pallas as pl
from jax.experimental.pallas import tpu as pltpu

THRESHOLD_FIRST_LAYER = 0.02


# ---------------------------------------------------------------------------
# Pallas kernel: conv(1->8, valid, no bias) + ReLU + "mult" feature chain.
# ---------------------------------------------------------------------------
def _first_level_kernel(pooled_ref, w_ref, o_ref, *, kh, kw, ho, wo):
    """One batch element per grid step.

    pooled_ref: (1, Hp_pad, Wp_pad) f32  AvgPool'd input, zero padded so the
                conv-output tile (Ho_pad, Wo_pad) has Ho_pad % 8 == 0 and
                Wo_pad % 128 == 0.
    w_ref:      (8*kh*kw,) f32 in SMEM   conv weights, filter-major.
    o_ref:      (1, 12, Ho_pad, Wo_pad) f32
    ho, wo:     logical (unpadded) conv-output extents.
    """
    t = THRESHOLD_FIRST_LAYER
    hpp, wpp = pooled_ref.shape[1], pooled_ref.shape[2]
    hop, wop = hpp - kh + 1, wpp - kw + 1

    # ---- weights: read the 8*kh*kw SMEM scalars once, up front -------------
    wv = [w_ref[i] for i in range(8 * kh * kw)]

    # ---- conv: hoist the kh*kw shifted taps, share across the 8 filters ----
    acc = None
    for dy in range(kh):
        for dx in range(kw):
            tap = pooled_ref[0, pl.ds(dy, hop), pl.ds(dx, wop)]
            k = dy * kw + dx
            if acc is None:
                acc = [wv[f * kh * kw + k] * tap for f in range(8)]
            else:
                acc = [acc[f] + wv[f * kh * kw + k] * tap for f in range(8)]

    relu = lambda a: jnp.maximum(a, 0.0)       # abs(relu(.)) == relu(.)
    v1, ov1 = relu(acc[0]), relu(acc[1])       # feature_V_1 / opposite_V_1
    h1, oh1 = relu(acc[2]), relu(acc[3])       # feature_H_1 / opposite_H_1
    d1 = relu(acc[4]) + relu(acc[6])           # feature_D_1
    d2 = relu(acc[5]) + relu(acc[7])           # feature_D_2

    # ---- shift-by-one helpers:  np.insert(np.delete(a, 0, ax), -1, 0, ax) --
    # out[j] = a[j+1] for j < N-2, out[N-2] = 0, out[N-1] = a[N-1]  (N logical)
    # Implemented as an XLU roll + two iota-selects (no slice/concat temps).
    col = lax.broadcasted_iota(jnp.int32, (hop, wop), 1)
    row = lax.broadcasted_iota(jnp.int32, (hop, wop), 0)
    keep_c, zero_c = col == (wo - 1), col == (wo - 2)
    keep_r, zero_r = row == (ho - 1), row == (ho - 2)
    zf = jnp.float32(0.0)

    def shift_c(a):                               # along lanes (width)
        r = pltpu.roll(a, wop - 1, axis=1)        # r[:, j] = a[:, (j+1) % wop]
        return jnp.where(keep_c, a, jnp.where(zero_c, zf, r))

    def shift_r(a):                               # along sublanes (height)
        r = pltpu.roll(a, hop - 1, axis=0)
        return jnp.where(keep_r, a, jnp.where(zero_r, zf, r))

    # ---- diagonal threshold masks, shared by both branches (booleans) ------
    bad_fd1 = d1 * shift_c(d1) > t
    bad_fd2 = d2 * shift_c(d2) > t
    bad_fdd1 = d1 * shift_r(d1) > t
    bad_fdd2 = d2 * shift_r(d2) > t

    def store(c, a):
        o_ref[0, c] = a.astype(o_ref.dtype)

    # ---- feature chain; each map is stored as soon as it is produced -------
    def branch(v, h, base):
        v2 = shift_r(v)                           # feature_V_2
        h2 = shift_c(h)                           # feature_H_2
        vert = v2 * v
        horiz = h2 * h
        store(base + 0, jnp.where(vert > t, zf, horiz))             # horizontal
        store(base + 2, jnp.where(horiz > t, zf, vert))             # vertical
        store(base + 1, jnp.where(bad_fd1, zf, shift_c(v2) * v))    # first diag
        store(base + 3, jnp.where(bad_fd2, zf, v2 * shift_c(v)))    # second diag
        store(base + 4, jnp.where(bad_fdd1, zf, shift_r(h2) * h))   # first diag down
        store(base + 5, jnp.where(bad_fdd2, zf, shift_r(h) * h2))   # second diag down

    branch(v1, h1, 0)       # channels 0..5
    branch(ov1, oh1, 6)     # channels 6..11 ("opposite" branch)


# ---------------------------------------------------------------------------
# Wrapper: AvgPool2d(2,2) glue, alignment padding + pallas_call.
# ---------------------------------------------------------------------------
def first_level_net(x, weight):
    """x: (B, 1, H, W) f32 NCHW; weight: (n_filters>=8, 1, kh, kw) f32."""
    b, c, h, w = x.shape
    assert c == 1
    n_filters, _, kh, kw = weight.shape
    assert n_filters >= 8

    hp, wp = h // 2, w // 2
    ho, wo = hp - kh + 1, wp - kw + 1
    assert ho >= 2 and wo >= 2, "shift-by-one features need Ho, Wo >= 2"

    # AvgPool2d(2, 2) glue in XLA.
    # TODO(synk): fusing the pool into the kernel would save one HBM round-trip
    # of the pooled array; kept in XLA because the kernel is VALU-bound and
    # lane-strided (stride-2) reads are not cleanly expressible in the kernel.
    pooled = x[:, 0, :2 * hp, :2 * wp].reshape(b, hp, 2, wp, 2).mean(axis=(2, 4))
    pooled = pooled.astype(jnp.float32)

    # Pad so the per-image conv-output tile is (8, 128)-aligned: lane-dense
    # full-width stores (no vst.msk) and native-extent rolls.  Padded rows /
    # cols are sliced off below; they never contaminate logical outputs.
    hop = ((ho + 7) // 8) * 8
    wop = ((wo + 127) // 128) * 128
    hpp, wpp = hop + kh - 1, wop + kw - 1
    pooled = jnp.pad(pooled, ((0, 0), (0, hpp - hp), (0, wpp - wp)))

    w_flat = weight.astype(jnp.float32)[:8].reshape(-1)   # (8*kh*kw,) -> SMEM

    kernel = functools.partial(_first_level_kernel, kh=kh, kw=kw, ho=ho, wo=wo)
    out = pl.pallas_call(
        kernel,
        out_shape=jax.ShapeDtypeStruct((b, 12, hop, wop), jnp.float32),
        grid_spec=pltpu.PrefetchScalarGridSpec(
            num_scalar_prefetch=0,
            grid=(b,),
            in_specs=[
                pl.BlockSpec((1, hpp, wpp), lambda i: (i, 0, 0)),
                pl.BlockSpec(memory_space=pltpu.MemorySpace.SMEM),
            ],
            out_specs=pl.BlockSpec((1, 12, hop, wop), lambda i: (i, 0, 0, 0)),
        ),
        # Batch axis "parallel" -> megacore sharding on v7x.  Per-block VMEM is
        # small at these tile sizes; raise vmem_limit_bytes only if multi-image
        # blocks are adopted for very large images.
        compiler_params=pltpu.CompilerParams(dimension_semantics=("parallel",)),
    )(pooled, w_flat)
    return out[:, :, :ho, :wo]


# ---------------------------------------------------------------------------
# Independent NumPy reference (mirrors the torch module's np.delete/np.insert).
# ---------------------------------------------------------------------------
def _np_reference(x, weight):
    t = THRESHOLD_FIRST_LAYER
    x = np.asarray(x, np.float32)
    w = np.asarray(weight, np.float32)
    b, _, h, wd = x.shape
    nf, _, kh, kw = w.shape
    hp, wp = h // 2, wd // 2
    pooled = x[:, 0, :2 * hp, :2 * wp].reshape(b, hp, 2, wp, 2).mean(axis=(2, 4))
    ho, wo = hp - kh + 1, wp - kw + 1
    conv = np.zeros((b, nf, ho, wo), np.float32)
    for f in range(nf):
        for dy in range(kh):
            for dx in range(kw):
                conv[:, f] += w[f, 0, dy, dx] * pooled[:, dy:dy + ho, dx:dx + wo]
    feats = np.maximum(conv, 0.0)

    fv1, fov1 = np.abs(feats[:, 0]), np.abs(feats[:, 1])
    fh1, foh1 = np.abs(feats[:, 2]), np.abs(feats[:, 3])
    fd1 = np.abs(feats[:, 4]) + np.abs(feats[:, 6])
    fd2 = np.abs(feats[:, 5]) + np.abs(feats[:, 7])

    def sh(a, ax):
        return np.insert(np.delete(a, 0, axis=ax), -1, 0, axis=ax)

    def vert_diag(v1):
        v2 = sh(v1, 1)
        return sh(v2, 2) * v1, v2 * sh(v1, 2), v2 * v1

    def horiz_diag_down(h1):
        h2 = sh(h1, 2)
        return sh(h2, 1) * h1, sh(h1, 1) * h2, h2 * h1

    def filt(v, h):
        return v * np.where(h > t, 0, 1), h * np.where(v > t, 0, 1)

    def filt_diag(a, bb, cc, dd):
        m1 = np.where(fd1 * sh(fd1, 2) > t, 0, 1)
        m2 = np.where(fd2 * sh(fd2, 2) > t, 0, 1)
        m3 = np.where(fd1 * sh(fd1, 1) > t, 0, 1)
        m4 = np.where(fd2 * sh(fd2, 1) > t, 0, 1)
        return a * m1, bb * m2, cc * m3, dd * m4

    d1a, d2a, vert = vert_diag(fv1)
    dd1a, dd2a, horiz = horiz_diag_down(fh1)
    vert, horiz = filt(vert, horiz)
    d1a, d2a, dd1a, dd2a = filt_diag(d1a, d2a, dd1a, dd2a)
    od1a, od2a, overt = vert_diag(fov1)
    odd1a, odd2a, ohoriz = horiz_diag_down(foh1)
    overt, ohoriz = filt(overt, ohoriz)
    od1a, od2a, odd1a, odd2a = filt_diag(od1a, od2a, odd1a, odd2a)
    new = np.asarray([horiz, d1a, vert, d2a, dd1a, dd2a,
                      ohoriz, od1a, overt, od2a, odd1a, odd2a])
    return np.swapaxes(new, 0, 1)


if __name__ == "__main__":
    key = jax.random.PRNGKey(0)
    kx, kwt = jax.random.split(key)

    B, H, W = 2, 16, 16            # x: (B, 1, H, W)  NCHW
    n_filters, kh, kw = 8, 3, 3    # conv weight: (8, 1, 3, 3)

    x = jax.random.normal(kx, (B, 1, H, W), dtype=jnp.float32)
    weight = 0.5 * jax.random.normal(kwt, (n_filters, 1, kh, kw), dtype=jnp.float32)

    out = first_level_net(x, weight)
    out = jax.block_until_ready(out)

    ref = _np_reference(np.asarray(x), np.asarray(weight))
    assert out.shape == (B, 12, H // 2 - kh + 1, W // 2 - kw + 1)
    np.testing.assert_allclose(np.asarray(out), ref.astype(np.float32),
                               rtol=1e-4, atol=1e-5)
    print("KERNEL_OK")
</pallas_src>

<mosaic_0001>
module attributes {stable_mosaic.version = 11 : i64} {
  func.func @_first_level_kernel(%arg0: i32, %arg1: memref<1x10x130xf32, #tpu.memory_space<vmem>>, %arg2: memref<72xf32, #tpu.memory_space<smem>>, %arg3: memref<1x12x8x128xf32, #tpu.memory_space<vmem>>) attributes {dimension_semantics = [#tpu.dimension_semantics<parallel>], iteration_bounds = array<i64: 2>, scalar_prefetch = 0 : i64, scratch_operands = 0 : i64, tpu.core_type = #tpu.core_type<tc>, window_params = [{transform_indices = @transform_0, window_bounds = array<i64: 1, 10, 130>}, {transform_indices = @transform_1, window_bounds = array<i64: 72>}, {transform_indices = @transform_2, window_bounds = array<i64: 1, 12, 8, 128>}]} {
    %c0 = arith.constant 0 : index
    %0 = memref.load %arg2[%c0] : memref<72xf32, #tpu.memory_space<smem>>
    %c1 = arith.constant 1 : index
    %1 = memref.load %arg2[%c1] : memref<72xf32, #tpu.memory_space<smem>>
    %c2 = arith.constant 2 : index
    %2 = memref.load %arg2[%c2] : memref<72xf32, #tpu.memory_space<smem>>
    %c3 = arith.constant 3 : index
    %3 = memref.load %arg2[%c3] : memref<72xf32, #tpu.memory_space<smem>>
    %c4 = arith.constant 4 : index
    %4 = memref.load %arg2[%c4] : memref<72xf32, #tpu.memory_space<smem>>
    %c5 = arith.constant 5 : index
    %5 = memref.load %arg2[%c5] : memref<72xf32, #tpu.memory_space<smem>>
    %c6 = arith.constant 6 : index
    %6 = memref.load %arg2[%c6] : memref<72xf32, #tpu.memory_space<smem>>
    %c7 = arith.constant 7 : index
    %7 = memref.load %arg2[%c7] : memref<72xf32, #tpu.memory_space<smem>>
    %c8 = arith.constant 8 : index
    %8 = memref.load %arg2[%c8] : memref<72xf32, #tpu.memory_space<smem>>
    %c9 = arith.constant 9 : index
    %9 = memref.load %arg2[%c9] : memref<72xf32, #tpu.memory_space<smem>>
    %c10 = arith.constant 10 : index
    %10 = memref.load %arg2[%c10] : memref<72xf32, #tpu.memory_space<smem>>
    %c11 = arith.constant 11 : index
    %11 = memref.load %arg2[%c11] : memref<72xf32, #tpu.memory_space<smem>>
    %c12 = arith.constant 12 : index
    %12 = memref.load %arg2[%c12] : memref<72xf32, #tpu.memory_space<smem>>
    %c13 = arith.constant 13 : index
    %13 = memref.load %arg2[%c13] : memref<72xf32, #tpu.memory_space<smem>>
    %c14 = arith.constant 14 : index
    %14 = memref.load %arg2[%c14] : memref<72xf32, #tpu.memory_space<smem>>
    %c15 = arith.constant 15 : index
    %15 = memref.load %arg2[%c15] : memref<72xf32, #tpu.memory_space<smem>>
    %c16 = arith.constant 16 : index
    %16 = memref.load %arg2[%c16] : memref<72xf32, #tpu.memory_space<smem>>
    %c17 = arith.constant 17 : index
    %17 = memref.load %arg2[%c17] : memref<72xf32, #tpu.memory_space<smem>>
    %c18 = arith.constant 18 : index
    %18 = memref.load %arg2[%c18] : memref<72xf32, #tpu.memory_space<smem>>
    %c19 = arith.constant 19 : index
    %19 = memref.load %arg2[%c19] : memref<72xf32, #tpu.memory_space<smem>>
    %c20 = arith.constant 20 : index
    %20 = memref.load %arg2[%c20] : memref<72xf32, #tpu.memory_space<smem>>
    %c21 = arith.constant 21 : index
    %21 = memref.load %arg2[%c21] : memref<72xf32, #tpu.memory_space<smem>>
    %c22 = arith.constant 22 : index
    %22 = memref.load %arg2[%c22] : memref<72xf32, #tpu.memory_space<smem>>
    %c23 = arith.constant 23 : index
    %23 = memref.load %arg2[%c23] : memref<72xf32, #tpu.memory_space<smem>>
    %c24 = arith.constant 24 : index
    %24 = memref.load %arg2[%c24] : memref<72xf32, #tpu.memory_space<smem>>
    %c25 = arith.constant 25 : index
    %25 = memref.load %arg2[%c25] : memref<72xf32, #tpu.memory_space<smem>>
    %c26 = arith.constant 26 : index
    %26 = memref.load %arg2[%c26] : memref<72xf32, #tpu.memory_space<smem>>
    %c27 = arith.constant 27 : index
    %27 = memref.load %arg2[%c27] : memref<72xf32, #tpu.memory_space<smem>>
    %c28 = arith.constant 28 : index
    %28 = memref.load %arg2[%c28] : memref<72xf32, #tpu.memory_space<smem>>
    %c29 = arith.constant 29 : index
    %29 = memref.load %arg2[%c29] : memref<72xf32, #tpu.memory_space<smem>>
    %c30 = arith.constant 30 : index
    %30 = memref.load %arg2[%c30] : memref<72xf32, #tpu.memory_space<smem>>
    %c31 = arith.constant 31 : index
    %31 = memref.load %arg2[%c31] : memref<72xf32, #tpu.memory_space<smem>>
    %c32 = arith.constant 32 : index
    %32 = memref.load %arg2[%c32] : memref<72xf32, #tpu.memory_space<smem>>
    %c33 = arith.constant 33 : index
    %33 = memref.load %arg2[%c33] : memref<72xf32, #tpu.memory_space<smem>>
    %c34 = arith.constant 34 : index
    %34 = memref.load %arg2[%c34] : memref<72xf32, #tpu.memory_space<smem>>
    %c35 = arith.constant 35 : index
    %35 = memref.load %arg2[%c35] : memref<72xf32, #tpu.memory_space<smem>>
    %c36 = arith.constant 36 : index
    %36 = memref.load %arg2[%c36] : memref<72xf32, #tpu.memory_space<smem>>
    %c37 = arith.constant 37 : index
    %37 = memref.load %arg2[%c37] : memref<72xf32, #tpu.memory_space<smem>>
    %c38 = arith.constant 38 : index
    %38 = memref.load %arg2[%c38] : memref<72xf32, #tpu.memory_space<smem>>
    %c39 = arith.constant 39 : index
    %39 = memref.load %arg2[%c39] : memref<72xf32, #tpu.memory_space<smem>>
    %c40 = arith.constant 40 : index
    %40 = memref.load %arg2[%c40] : memref<72xf32, #tpu.memory_space<smem>>
    %c41 = arith.constant 41 : index
    %41 = memref.load %arg2[%c41] : memref<72xf32, #tpu.memory_space<smem>>
    %c42 = arith.constant 42 : index
    %42 = memref.load %arg2[%c42] : memref<72xf32, #tpu.memory_space<smem>>
    %c43 = arith.constant 43 : index
    %43 = memref.load %arg2[%c43] : memref<72xf32, #tpu.memory_space<smem>>
    %c44 = arith.constant 44 : index
    %44 = memref.load %arg2[%c44] : memref<72xf32, #tpu.memory_space<smem>>
    %c45 = arith.constant 45 : index
    %45 = memref.load %arg2[%c45] : memref<72xf32, #tpu.memory_space<smem>>
    %c46 = arith.constant 46 : index
    %46 = memref.load %arg2[%c46] : memref<72xf32, #tpu.memory_space<smem>>
    %c47 = arith.constant 47 : index
    %47 = memref.load %arg2[%c47] : memref<72xf32, #tpu.memory_space<smem>>
    %c48 = arith.constant 48 : index
    %48 = memref.load %arg2[%c48] : memref<72xf32, #tpu.memory_space<smem>>
    %c49 = arith.constant 49 : index
    %49 = memref.load %arg2[%c49] : memref<72xf32, #tpu.memory_space<smem>>
    %c50 = arith.constant 50 : index
    %50 = memref.load %arg2[%c50] : memref<72xf32, #tpu.memory_space<smem>>
    %c51 = arith.constant 51 : index
    %51 = memref.load %arg2[%c51] : memref<72xf32, #tpu.memory_space<smem>>
    %c52 = arith.constant 52 : index
    %52 = memref.load %arg2[%c52] : memref<72xf32, #tpu.memory_space<smem>>
    %c53 = arith.constant 53 : index
    %53 = memref.load %arg2[%c53] : memref<72xf32, #tpu.memory_space<smem>>
    %c54 = arith.constant 54 : index
    %54 = memref.load %arg2[%c54] : memref<72xf32, #tpu.memory_space<smem>>
    %c55 = arith.constant 55 : index
    %55 = memref.load %arg2[%c55] : memref<72xf32, #tpu.memory_space<smem>>
    %c56 = arith.constant 56 : index
    %56 = memref.load %arg2[%c56] : memref<72xf32, #tpu.memory_space<smem>>
    %c57 = arith.constant 57 : index
    %57 = memref.load %arg2[%c57] : memref<72xf32, #tpu.memory_space<smem>>
    %c58 = arith.constant 58 : index
    %58 = memref.load %arg2[%c58] : memref<72xf32, #tpu.memory_space<smem>>
    %c59 = arith.constant 59 : index
    %59 = memref.load %arg2[%c59] : memref<72xf32, #tpu.memory_space<smem>>
    %c60 = arith.constant 60 : index
    %60 = memref.load %arg2[%c60] : memref<72xf32, #tpu.memory_space<smem>>
    %c61 = arith.constant 61 : index
    %61 = memref.load %arg2[%c61] : memref<72xf32, #tpu.memory_space<smem>>
    %c62 = arith.constant 62 : index
    %62 = memref.load %arg2[%c62] : memref<72xf32, #tpu.memory_space<smem>>
    %c63 = arith.constant 63 : index
    %63 = memref.load %arg2[%c63] : memref<72xf32, #tpu.memory_space<smem>>
    %c64 = arith.constant 64 : index
    %64 = memref.load %arg2[%c64] : memref<72xf32, #tpu.memory_space<smem>>
    %c65 = arith.constant 65 : index
    %65 = memref.load %arg2[%c65] : memref<72xf32, #tpu.memory_space<smem>>
    %c66 = arith.constant 66 : index
    %66 = memref.load %arg2[%c66] : memref<72xf32, #tpu.memory_space<smem>>
    %c67 = arith.constant 67 : index
    %67 = memref.load %arg2[%c67] : memref<72xf32, #tpu.memory_space<smem>>
    %c68 = arith.constant 68 : index
    %68 = memref.load %arg2[%c68] : memref<72xf32, #tpu.memory_space<smem>>
    %c69 = arith.constant 69 : index
    %69 = memref.load %arg2[%c69] : memref<72xf32, #tpu.memory_space<smem>>
    %c70 = arith.constant 70 : index
    %70 = memref.load %arg2[%c70] : memref<72xf32, #tpu.memory_space<smem>>
    %c71 = arith.constant 71 : index
    %71 = memref.load %arg2[%c71] : memref<72xf32, #tpu.memory_space<smem>>
    %c0_0 = arith.constant 0 : index
    %c0_1 = arith.constant 0 : index
    %c0_2 = arith.constant 0 : index
    %72 = vector.load %arg1[%c0_0, %c0_1, %c0_2] : memref<1x10x130xf32, #tpu.memory_space<vmem>>, vector<1x8x128xf32>
    %73 = vector.shape_cast %72 : vector<1x8x128xf32> to vector<8x128xf32>
    %74 = vector.broadcast %0 : f32 to vector<8x128xf32>
    %75 = arith.mulf %74, %73 : vector<8x128xf32>
    %76 = vector.broadcast %9 : f32 to vector<8x128xf32>
    %77 = arith.mulf %76, %73 : vector<8x128xf32>
    %78 = vector.broadcast %18 : f32 to vector<8x128xf32>
    %79 = arith.mulf %78, %73 : vector<8x128xf32>
    %80 = vector.broadcast %27 : f32 to vector<8x128xf32>
    %81 = arith.mulf %80, %73 : vector<8x128xf32>
    %82 = vector.broadcast %36 : f32 to vector<8x128xf32>
    %83 = arith.mulf %82, %73 : vector<8x128xf32>
    %84 = vector.broadcast %45 : f32 to vector<8x128xf32>
    %85 = arith.mulf %84, %73 : vector<8x128xf32>
    %86 = vector.broadcast %54 : f32 to vector<8x128xf32>
    %87 = arith.mulf %86, %73 : vector<8x128xf32>
    %88 = vector.broadcast %63 : f32 to vector<8x128xf32>
    %89 = arith.mulf %88, %73 : vector<8x128xf32>
    %c0_3 = arith.constant 0 : index
    %c0_4 = arith.constant 0 : index
    %c1_5 = arith.constant 1 : index
    %90 = vector.load %arg1[%c0_3, %c0_4, %c1_5] : memref<1x10x130xf32, #tpu.memory_space<vmem>>, vector<1x8x128xf32>
    %91 = vector.shape_cast %90 : vector<1x8x128xf32> to vector<8x128xf32>
    %92 = vector.broadcast %1 : f32 to vector<8x128xf32>
    %93 = arith.mulf %92, %91 : vector<8x128xf32>
    %94 = arith.addf %75, %93 : vector<8x128xf32>
    %95 = vector.broadcast %10 : f32 to vector<8x128xf32>
    %96 = arith.mulf %95, %91 : vector<8x128xf32>
    %97 = arith.addf %77, %96 : vector<8x128xf32>
    %98 = vector.broadcast %19 : f32 to vector<8x128xf32>
    %99 = arith.mulf %98, %91 : vector<8x128xf32>
    %100 = arith.addf %79, %99 : vector<8x128xf32>
    %101 = vector.broadcast %28 : f32 to vector<8x128xf32>
    %102 = arith.mulf %101, %91 : vector<8x128xf32>
    %103 = arith.addf %81, %102 : vector<8x128xf32>
    %104 = vector.broadcast %37 : f32 to vector<8x128xf32>
    %105 = arith.mulf %104, %91 : vector<8x128xf32>
    %106 = arith.addf %83, %105 : vector<8x128xf32>
    %107 = vector.broadcast %46 : f32 to vector<8x128xf32>
    %108 = arith.mulf %107, %91 : vector<8x128xf32>
    %109 = arith.addf %85, %108 : vector<8x128xf32>
    %110 = vector.broadcast %55 : f32 to vector<8x128xf32>
    %111 = arith.mulf %110, %91 : vector<8x128xf32>
    %112 = arith.addf %87, %111 : vector<8x128xf32>
    %113 = vector.broadcast %64 : f32 to vector<8x128xf32>
    %114 = arith.mulf %113, %91 : vector<8x128xf32>
    %115 = arith.addf %89, %114 : vector<8x128xf32>
    %c0_6 = arith.constant 0 : index
    %c0_7 = arith.constant 0 : index
    %c2_8 = arith.constant 2 : index
    %116 = vector.load %arg1[%c0_6, %c0_7, %c2_8] : memref<1x10x130xf32, #tpu.memory_space<vmem>>, vector<1x8x128xf32>
    %117 = vector.shape_cast %116 : vector<1x8x128xf32> to vector<8x128xf32>
    %118 = vector.broadcast %2 : f32 to vector<8x128xf32>
    %119 = arith.mulf %118, %117 : vector<8x128xf32>
    %120 = arith.addf %94, %119 : vector<8x128xf32>
    %121 = vector.broadcast %11 : f32 to vector<8x128xf32>
    %122 = arith.mulf %121, %117 : vector<8x128xf32>
    %123 = arith.addf %97, %122 : vector<8x128xf32>
    %124 = vector.broadcast %20 : f32 to vector<8x128xf32>
    %125 = arith.mulf %124, %117 : vector<8x128xf32>
    %126 = arith.addf %100, %125 : vector<8x128xf32>
    %127 = vector.broadcast %29 : f32 to vector<8x128xf32>
    %128 = arith.mulf %127, %117 : vector<8x128xf32>
    %129 = arith.addf %103, %128 : vector<8x128xf32>
    %130 = vector.broadcast %38 : f32 to vector<8x128xf32>
    %131 = arith.mulf %130, %117 : vector<8x128xf32>
    %132 = arith.addf %106, %131 : vector<8x128xf32>
    %133 = vector.broadcast %47 : f32 to vector<8x128xf32>
    %134 = arith.mulf %133, %117 : vector<8x128xf32>
    %135 = arith.addf %109, %134 : vector<8x128xf32>
    %136 = vector.broadcast %56 : f32 to vector<8x128xf32>
    %137 = arith.mulf %136, %117 : vector<8x128xf32>
    %138 = arith.addf %112, %137 : vector<8x128xf32>
    %139 = vector.broadcast %65 : f32 to vector<8x128xf32>
    %140 = arith.mulf %139, %117 : vector<8x128xf32>
    %141 = arith.addf %115, %140 : vector<8x128xf32>
    %c0_9 = arith.constant 0 : index
    %c1_10 = arith.constant 1 : index
    %c0_11 = arith.constant 0 : index
    %142 = vector.load %arg1[%c0_9, %c1_10, %c0_11] : memref<1x10x130xf32, #tpu.memory_space<vmem>>, vector<1x8x128xf32>
    %143 = vector.shape_cast %142 : vector<1x8x128xf32> to vector<8x128xf32>
    %144 = vector.broadcast %3 : f32 to vector<8x128xf32>
    %145 = arith.mulf %144, %143 : vector<8x128xf32>
    %146 = arith.addf %120, %145 : vector<8x128xf32>
    %147 = vector.broadcast %12 : f32 to vector<8x128xf32>
    %148 = arith.mulf %147, %143 : vector<8x128xf32>
    %149 = arith.addf %123, %148 : vector<8x128xf32>
    %150 = vector.broadcast %21 : f32 to vector<8x128xf32>
    %151 = arith.mulf %150, %143 : vector<8x128xf32>
    %152 = arith.addf %126, %151 : vector<8x128xf32>
    %153 = vector.broadcast %30 : f32 to vector<8x128xf32>
    %154 = arith.mulf %153, %143 : vector<8x128xf32>
    %155 = arith.addf %129, %154 : vector<8x128xf32>
    %156 = vector.broadcast %39 : f32 to vector<8x128xf32>
    %157 = arith.mulf %156, %143 : vector<8x128xf32>
    %158 = arith.addf %132, %157 : vector<8x128xf32>
    %159 = vector.broadcast %48 : f32 to vector<8x128xf32>
    %160 = arith.mulf %159, %143 : vector<8x128xf32>
    %161 = arith.addf %135, %160 : vector<8x128xf32>
    %162 = vector.broadcast %57 : f32 to vector<8x128xf32>
    %163 = arith.mulf %162, %143 : vector<8x128xf32>
    %164 = arith.addf %138, %163 : vector<8x128xf32>
    %165 = vector.broadcast %66 : f32 to vector<8x128xf32>
    %166 = arith.mulf %165, %143 : vector<8x128xf32>
    %167 = arith.addf %141, %166 : vector<8x128xf32>
    %c0_12 = arith.constant 0 : index
    %c1_13 = arith.constant 1 : index
    %c1_14 = arith.constant 1 : index
    %168 = vector.load %arg1[%c0_12, %c1_13, %c1_14] : memref<1x10x130xf32, #tpu.memory_space<vmem>>, vector<1x8x128xf32>
    %169 = vector.shape_cast %168 : vector<1x8x128xf32> to vector<8x128xf32>
    %170 = vector.broadcast %4 : f32 to vector<8x128xf32>
    %171 = arith.mulf %170, %169 : vector<8x128xf32>
    %172 = arith.addf %146, %171 : vector<8x128xf32>
    %173 = vector.broadcast %13 : f32 to vector<8x128xf32>
    %174 = arith.mulf %173, %169 : vector<8x128xf32>
    %175 = arith.addf %149, %174 : vector<8x128xf32>
    %176 = vector.broadcast %22 : f32 to vector<8x128xf32>
    %177 = arith.mulf %176, %169 : vector<8x128xf32>
    %178 = arith.addf %152, %177 : vector<8x128xf32>
    %179 = vector.broadcast %31 : f32 to vector<8x128xf32>
    %180 = arith.mulf %179, %169 : vector<8x128xf32>
    %181 = arith.addf %155, %180 : vector<8x128xf32>
    %182 = vector.broadcast %40 : f32 to vector<8x128xf32>
    %183 = arith.mulf %182, %169 : vector<8x128xf32>
    %184 = arith.addf %158, %183 : vector<8x128xf32>
    %185 = vector.broadcast %49 : f32 to vector<8x128xf32>
    %186 = arith.mulf %185, %169 : vector<8x128xf32>
    %187 = arith.addf %161, %186 : vector<8x128xf32>
    %188 = vector.broadcast %58 : f32 to vector<8x128xf32>
    %189 = arith.mulf %188, %169 : vector<8x128xf32>
    %190 = arith.addf %164, %189 : vector<8x128xf32>
    %191 = vector.broadcast %67 : f32 to vector<8x128xf32>
    %192 = arith.mulf %191, %169 : vector<8x128xf32>
    %193 = arith.addf %167, %192 : vector<8x128xf32>
    %c0_15 = arith.constant 0 : index
    %c1_16 = arith.constant 1 : index
    %c2_17 = arith.constant 2 : index
    %194 = vector.load %arg1[%c0_15, %c1_16, %c2_17] : memref<1x10x130xf32, #tpu.memory_space<vmem>>, vector<1x8x128xf32>
    %195 = vector.shape_cast %194 : vector<1x8x128xf32> to vector<8x128xf32>
    %196 = vector.broadcast %5 : f32 to vector<8x128xf32>
    %197 = arith.mulf %196, %195 : vector<8x128xf32>
    %198 = arith.addf %172, %197 : vector<8x128xf32>
    %199 = vector.broadcast %14 : f32 to vector<8x128xf32>
    %200 = arith.mulf %199, %195 : vector<8x128xf32>
    %201 = arith.addf %175, %200 : vector<8x128xf32>
    %202 = vector.broadcast %23 : f32 to vector<8x128xf32>
    %203 = arith.mulf %202, %195 : vector<8x128xf32>
    %204 = arith.addf %178, %203 : vector<8x128xf32>
    %205 = vector.broadcast %32 : f32 to vector<8x128xf32>
    %206 = arith.mulf %205, %195 : vector<8x128xf32>
    %207 = arith.addf %181, %206 : vector<8x128xf32>
    %208 = vector.broadcast %41 : f32 to vector<8x128xf32>
    %209 = arith.mulf %208, %195 : vector<8x128xf32>
    %210 = arith.addf %184, %209 : vector<8x128xf32>
    %211 = vector.broadcast %50 : f32 to vector<8x128xf32>
    %212 = arith.mulf %211, %195 : vector<8x128xf32>
    %213 = arith.addf %187, %212 : vector<8x128xf32>
    %214 = vector.broadcast %59 : f32 to vector<8x128xf32>
    %215 = arith.mulf %214, %195 : vector<8x128xf32>
    %216 = arith.addf %190, %215 : vector<8x128xf32>
    %217 = vector.broadcast %68 : f32 to vector<8x128xf32>
    %218 = arith.mulf %217, %195 : vector<8x128xf32>
    %219 = arith.addf %193, %218 : vector<8x128xf32>
    %c0_18 = arith.constant 0 : index
    %c2_19 = arith.constant 2 : index
    %c0_20 = arith.constant 0 : index
    %220 = vector.load %arg1[%c0_18, %c2_19, %c0_20] : memref<1x10x130xf32, #tpu.memory_space<vmem>>, vector<1x8x128xf32>
    %221 = vector.shape_cast %220 : vector<1x8x128xf32> to vector<8x128xf32>
    %222 = vector.broadcast %6 : f32 to vector<8x128xf32>
    %223 = arith.mulf %222, %221 : vector<8x128xf32>
    %224 = arith.addf %198, %223 : vector<8x128xf32>
    %225 = vector.broadcast %15 : f32 to vector<8x128xf32>
    %226 = arith.mulf %225, %221 : vector<8x128xf32>
    %227 = arith.addf %201, %226 : vector<8x128xf32>
    %228 = vector.broadcast %24 : f32 to vector<8x128xf32>
    %229 = arith.mulf %228, %221 : vector<8x128xf32>
    %230 = arith.addf %204, %229 : vector<8x128xf32>
    %231 = vector.broadcast %33 : f32 to vector<8x128xf32>
    %232 = arith.mulf %231, %221 : vector<8x128xf32>
    %233 = arith.addf %207, %232 : vector<8x128xf32>
    %234 = vector.broadcast %42 : f32 to vector<8x128xf32>
    %235 = arith.mulf %234, %221 : vector<8x128xf32>
    %236 = arith.addf %210, %235 : vector<8x128xf32>
    %237 = vector.broadcast %51 : f32 to vector<8x128xf32>
    %238 = arith.mulf %237, %221 : vector<8x128xf32>
    %239 = arith.addf %213, %238 : vector<8x128xf32>
    %240 = vector.broadcast %60 : f32 to vector<8x128xf32>
    %241 = arith.mulf %240, %221 : vector<8x128xf32>
    %242 = arith.addf %216, %241 : vector<8x128xf32>
    %243 = vector.broadcast %69 : f32 to vector<8x128xf32>
    %244 = arith.mulf %243, %221 : vector<8x128xf32>
    %245 = arith.addf %219, %244 : vector<8x128xf32>
    %c0_21 = arith.constant 0 : index
    %c2_22 = arith.constant 2 : index
    %c1_23 = arith.constant 1 : index
    %246 = vector.load %arg1[%c0_21, %c2_22, %c1_23] : memref<1x10x130xf32, #tpu.memory_space<vmem>>, vector<1x8x128xf32>
    %247 = vector.shape_cast %246 : vector<1x8x128xf32> to vector<8x128xf32>
    %248 = vector.broadcast %7 : f32 to vector<8x128xf32>
    %249 = arith.mulf %248, %247 : vector<8x128xf32>
    %250 = arith.addf %224, %249 : vector<8x128xf32>
    %251 = vector.broadcast %16 : f32 to vector<8x128xf32>
    %252 = arith.mulf %251, %247 : vector<8x128xf32>
    %253 = arith.addf %227, %252 : vector<8x128xf32>
    %254 = vector.broadcast %25 : f32 to vector<8x128xf32>
    %255 = arith.mulf %254, %247 : vector<8x128xf32>
    %256 = arith.addf %230, %255 : vector<8x128xf32>
    %257 = vector.broadcast %34 : f32 to vector<8x128xf32>
    %258 = arith.mulf %257, %247 : vector<8x128xf32>
    %259 = arith.addf %233, %258 : vector<8x128xf32>
    %260 = vector.broadcast %43 : f32 to vector<8x128xf32>
    %261 = arith.mulf %260, %247 : vector<8x128xf32>
    %262 = arith.addf %236, %261 : vector<8x128xf32>
    %263 = vector.broadcast %52 : f32 to vector<8x128xf32>
    %264 = arith.mulf %263, %247 : vector<8x128xf32>
    %265 = arith.addf %239, %264 : vector<8x128xf32>
    %266 = vector.broadcast %61 : f32 to vector<8x128xf32>
    %267 = arith.mulf %266, %247 : vector<8x128xf32>
    %268 = arith.addf %242, %267 : vector<8x128xf32>
    %269 = vector.broadcast %70 : f32 to vector<8x128xf32>
    %270 = arith.mulf %269, %247 : vector<8x128xf32>
    %271 = arith.addf %245, %270 : vector<8x128xf32>
    %c0_24 = arith.constant 0 : index
    %c2_25 = arith.constant 2 : index
    %c2_26 = arith.constant 2 : index
    %272 = vector.load %arg1[%c0_24, %c2_25, %c2_26] : memref<1x10x130xf32, #tpu.memory_space<vmem>>, vector<1x8x128xf32>
    %273 = vector.shape_cast %272 : vector<1x8x128xf32> to vector<8x128xf32>
    %274 = vector.broadcast %8 : f32 to vector<8x128xf32>
    %275 = arith.mulf %274, %273 : vector<8x128xf32>
    %276 = arith.addf %250, %275 : vector<8x128xf32>
    %277 = vector.broadcast %17 : f32 to vector<8x128xf32>
    %278 = arith.mulf %277, %273 : vector<8x128xf32>
    %279 = arith.addf %253, %278 : vector<8x128xf32>
    %280 = vector.broadcast %26 : f32 to vector<8x128xf32>
    %281 = arith.mulf %280, %273 : vector<8x128xf32>
    %282 = arith.addf %256, %281 : vector<8x128xf32>
    %283 = vector.broadcast %35 : f32 to vector<8x128xf32>
    %284 = arith.mulf %283, %273 : vector<8x128xf32>
    %285 = arith.addf %259, %284 : vector<8x128xf32>
    %286 = vector.broadcast %44 : f32 to vector<8x128xf32>
    %287 = arith.mulf %286, %273 : vector<8x128xf32>
    %288 = arith.addf %262, %287 : vector<8x128xf32>
    %289 = vector.broadcast %53 : f32 to vector<8x128xf32>
    %290 = arith.mulf %289, %273 : vector<8x128xf32>
    %291 = arith.addf %265, %290 : vector<8x128xf32>
    %292 = vector.broadcast %62 : f32 to vector<8x128xf32>
    %293 = arith.mulf %292, %273 : vector<8x128xf32>
    %294 = arith.addf %268, %293 : vector<8x128xf32>
    %295 = vector.broadcast %71 : f32 to vector<8x128xf32>
    %296 = arith.mulf %295, %273 : vector<8x128xf32>
    %297 = arith.addf %271, %296 : vector<8x128xf32>
    %cst = arith.constant 0.000000e+00 : f32
    %298 = vector.broadcast %cst : f32 to vector<8x128xf32>
    %299 = arith.maximumf %276, %298 : vector<8x128xf32>
    %cst_27 = arith.constant 0.000000e+00 : f32
    %300 = vector.broadcast %cst_27 : f32 to vector<8x128xf32>
    %301 = arith.maximumf %279, %300 : vector<8x128xf32>
    %cst_28 = arith.constant 0.000000e+00 : f32
    %302 = vector.broadcast %cst_28 : f32 to vector<8x128xf32>
    %303 = arith.maximumf %282, %302 : vector<8x128xf32>
    %cst_29 = arith.constant 0.000000e+00 : f32
    %304 = vector.broadcast %cst_29 : f32 to vector<8x128xf32>
    %305 = arith.maximumf %285, %304 : vector<8x128xf32>
    %cst_30 = arith.constant 0.000000e+00 : f32
    %306 = vector.broadcast %cst_30 : f32 to vector<8x128xf32>
    %307 = arith.maximumf %288, %306 : vector<8x128xf32>
    %cst_31 = arith.constant 0.000000e+00 : f32
    %308 = vector.broadcast %cst_31 : f32 to vector<8x128xf32>
    %309 = arith.maximumf %294, %308 : vector<8x128xf32>
    %310 = arith.addf %307, %309 : vector<8x128xf32>
    %cst_32 = arith.constant 0.000000e+00 : f32
    %311 = vector.broadcast %cst_32 : f32 to vector<8x128xf32>
    %312 = arith.maximumf %291, %311 : vector<8x128xf32>
    %cst_33 = arith.constant 0.000000e+00 : f32
    %313 = vector.broadcast %cst_33 : f32 to vector<8x128xf32>
    %314 = arith.maximumf %297, %313 : vector<8x128xf32>
    %315 = arith.addf %312, %314 : vector<8x128xf32>
    %316 = tpu.iota {dimensions = array<i32: 1>} : vector<8x128xi32>
    %317 = tpu.iota {dimensions = array<i32: 0>} : vector<8x128xi32>
    %c5_i32 = arith.constant 5 : i32
    %318 = vector.broadcast %c5_i32 : i32 to vector<8x128xi32>
    %319 = arith.cmpi eq, %316, %318 : vector<8x128xi32>
    %c4_i32 = arith.constant 4 : i32
    %320 = vector.broadcast %c4_i32 : i32 to vector<8x128xi32>
    %321 = arith.cmpi eq, %316, %320 : vector<8x128xi32>
    %c5_i32_34 = arith.constant 5 : i32
    %322 = vector.broadcast %c5_i32_34 : i32 to vector<8x128xi32>
    %323 = arith.cmpi eq, %317, %322 : vector<8x128xi32>
    %c4_i32_35 = arith.constant 4 : i32
    %324 = vector.broadcast %c4_i32_35 : i32 to vector<8x128xi32>
    %325 = arith.cmpi eq, %317, %324 : vector<8x128xi32>
    %c127_i32 = arith.constant 127 : i32
    %326 = tpu.dynamic_rotate %310 by %c127_i32 dim 1 : vector<8x128xf32>, i32 -> vector<8x128xf32>
    %cst_36 = arith.constant 0.000000e+00 : f32
    %327 = vector.broadcast %cst_36 : f32 to vector<8x128xf32>
    %328 = arith.select %321, %327, %326 : vector<8x128xi1>, vector<8x128xf32>
    %329 = arith.select %319, %310, %328 : vector<8x128xi1>, vector<8x128xf32>
    %330 = arith.mulf %310, %329 : vector<8x128xf32>
    %cst_37 = arith.constant 2.000000e-02 : f32
    %331 = vector.broadcast %cst_37 : f32 to vector<8x128xf32>
    %332 = arith.cmpf ogt, %330, %331 : vector<8x128xf32>
    %c127_i32_38 = arith.constant 127 : i32
    %333 = tpu.dynamic_rotate %315 by %c127_i32_38 dim 1 : vector<8x128xf32>, i32 -> vector<8x128xf32>
    %cst_39 = arith.constant 0.000000e+00 : f32
    %334 = vector.broadcast %cst_39 : f32 to vector<8x128xf32>
    %335 = arith.select %321, %334, %333 : vector<8x128xi1>, vector<8x128xf32>
    %336 = arith.select %319, %315, %335 : vector<8x128xi1>, vector<8x128xf32>
    %337 = arith.mulf %315, %336 : vector<8x128xf32>
    %cst_40 = arith.constant 2.000000e-02 : f32
    %338 = vector.broadcast %cst_40 : f32 to vector<8x128xf32>
    %339 = arith.cmpf ogt, %337, %338 : vector<8x128xf32>
    %c7_i32 = arith.constant 7 : i32
    %340 = tpu.dynamic_rotate %310 by %c7_i32 dim 0 : vector<8x128xf32>, i32 -> vector<8x128xf32>
    %cst_41 = arith.constant 0.000000e+00 : f32
    %341 = vector.broadcast %cst_41 : f32 to vector<8x128xf32>
    %342 = arith.select %325, %341, %340 : vector<8x128xi1>, vector<8x128xf32>
    %343 = arith.select %323, %310, %342 : vector<8x128xi1>, vector<8x128xf32>
    %344 = arith.mulf %310, %343 : vector<8x128xf32>
    %cst_42 = arith.constant 2.000000e-02 : f32
    %345 = vector.broadcast %cst_42 : f32 to vector<8x128xf32>
    %346 = arith.cmpf ogt, %344, %345 : vector<8x128xf32>
    %c7_i32_43 = arith.constant 7 : i32
    %347 = tpu.dynamic_rotate %315 by %c7_i32_43 dim 0 : vector<8x128xf32>, i32 -> vector<8x128xf32>
    %cst_44 = arith.constant 0.000000e+00 : f32
    %348 = vector.broadcast %cst_44 : f32 to vector<8x128xf32>
    %349 = arith.select %325, %348, %347 : vector<8x128xi1>, vector<8x128xf32>
    %350 = arith.select %323, %315, %349 : vector<8x128xi1>, vector<8x128xf32>
    %351 = arith.mulf %315, %350 : vector<8x128xf32>
    %cst_45 = arith.constant 2.000000e-02 : f32
    %352 = vector.broadcast %cst_45 : f32 to vector<8x128xf32>
    %353 = arith.cmpf ogt, %351, %352 : vector<8x128xf32>
    %c7_i32_46 = arith.constant 7 : i32
    %354 = tpu.dynamic_rotate %299 by %c7_i32_46 dim 0 : vector<8x128xf32>, i32 -> vector<8x128xf32>
    %cst_47 = arith.constant 0.000000e+00 : f32
    %355 = vector.broadcast %cst_47 : f32 to vector<8x128xf32>
    %356 = arith.select %325, %355, %354 : vector<8x128xi1>, vector<8x128xf32>
    %357 = arith.select %323, %299, %356 : vector<8x128xi1>, vector<8x128xf32>
    %c127_i32_48 = arith.constant 127 : i32
    %358 = tpu.dynamic_rotate %303 by %c127_i32_48 dim 1 : vector<8x128xf32>, i32 -> vector<8x128xf32>
    %cst_49 = arith.constant 0.000000e+00 : f32
    %359 = vector.broadcast %cst_49 : f32 to vector<8x128xf32>
    %360 = arith.select %321, %359, %358 : vector<8x128xi1>, vector<8x128xf32>
    %361 = arith.select %319, %303, %360 : vector<8x128xi1>, vector<8x128xf32>
    %362 = arith.mulf %357, %299 : vector<8x128xf32>
    %363 = arith.mulf %361, %303 : vector<8x128xf32>
    %cst_50 = arith.constant 2.000000e-02 : f32
    %364 = vector.broadcast %cst_50 : f32 to vector<8x128xf32>
    %365 = arith.cmpf ogt, %362, %364 : vector<8x128xf32>
    %cst_51 = arith.constant 0.000000e+00 : f32
    %366 = vector.broadcast %cst_51 : f32 to vector<8x128xf32>
    %367 = arith.select %365, %366, %363 : vector<8x128xi1>, vector<8x128xf32>
    %c0_52 = arith.constant 0 : index
    %c0_53 = arith.constant 0 : index
    %c0_54 = arith.constant 0 : index
    %c0_55 = arith.constant 0 : index
    %368 = vector.load %arg3[%c0_52, %c0_53, %c0_54, %c0_55] : memref<1x12x8x128xf32, #tpu.memory_space<vmem>>, vector<1x1x8x128xf32>
    %369 = vector.shape_cast %368 : vector<1x1x8x128xf32> to vector<8x128xf32>
    %370 = vector.shape_cast %367 : vector<8x128xf32> to vector<1x1x8x128xf32>
    tpu.vector_store %arg3[%c0_52, %c0_53, %c0_54, %c0_55], %370 {strides = array<i32>} : memref<1x12x8x128xf32, #tpu.memory_space<vmem>>, vector<1x1x8x128xf32>,
    %cst_56 = arith.constant 2.000000e-02 : f32
    %371 = vector.broadcast %cst_56 : f32 to vector<8x128xf32>
    %372 = arith.cmpf ogt, %363, %371 : vector<8x128xf32>
    %cst_57 = arith.constant 0.000000e+00 : f32
    %373 = vector.broadcast %cst_57 : f32 to vector<8x128xf32>
    %374 = arith.select %372, %373, %362 : vector<8x128xi1>, vector<8x128xf32>
    %c0_58 = arith.constant 0 : index
    %c2_59 = arith.constant 2 : index
    %c0_60 = arith.constant 0 : index
    %c0_61 = arith.constant 0 : index
    %375 = vector.load %arg3[%c0_58, %c2_59, %c0_60, %c0_61] : memref<1x12x8x128xf32, #tpu.memory_space<vmem>>, vector<1x1x8x128xf32>
    %376 = vector.shape_cast %375 : vector<1x1x8x128xf32> to vector<8x128xf32>
    %377 = vector.shape_cast %374 : vector<8x128xf32> to vector<1x1x8x128xf32>
    tpu.vector_store %arg3[%c0_58, %c2_59, %c0_60, %c0_61], %377 {strides = array<i32>} : memref<1x12x8x128xf32, #tpu.memory_space<vmem>>, vector<1x1x8x128xf32>,
    %c127_i32_62 = arith.constant 127 : i32
    %378 = tpu.dynamic_rotate %357 by %c127_i32_62 dim 1 : vector<8x128xf32>, i32 -> vector<8x128xf32>
    %cst_63 = arith.constant 0.000000e+00 : f32
    %379 = vector.broadcast %cst_63 : f32 to vector<8x128xf32>
    %380 = arith.select %321, %379, %378 : vector<8x128xi1>, vector<8x128xf32>
    %381 = arith.select %319, %357, %380 : vector<8x128xi1>, vector<8x128xf32>
    %382 = arith.mulf %381, %299 : vector<8x128xf32>
    %cst_64 = arith.constant 0.000000e+00 : f32
    %383 = vector.broadcast %cst_64 : f32 to vector<8x128xf32>
    %384 = arith.select %332, %383, %382 : vector<8x128xi1>, vector<8x128xf32>
    %c0_65 = arith.constant 0 : index
    %c1_66 = arith.constant 1 : index
    %c0_67 = arith.constant 0 : index
    %c0_68 = arith.constant 0 : index
    %385 = vector.load %arg3[%c0_65, %c1_66, %c0_67, %c0_68] : memref<1x12x8x128xf32, #tpu.memory_space<vmem>>, vector<1x1x8x128xf32>
    %386 = vector.shape_cast %385 : vector<1x1x8x128xf32> to vector<8x128xf32>
    %387 = vector.shape_cast %384 : vector<8x128xf32> to vector<1x1x8x128xf32>
    tpu.vector_store %arg3[%c0_65, %c1_66, %c0_67, %c0_68], %387 {strides = array<i32>} : memref<1x12x8x128xf32, #tpu.memory_space<vmem>>, vector<1x1x8x128xf32>,
    %c127_i32_69 = arith.constant 127 : i32
    %388 = tpu.dynamic_rotate %299 by %c127_i32_69 dim 1 : vector<8x128xf32>, i32 -> vector<8x128xf32>
    %cst_70 = arith.constant 0.000000e+00 : f32
    %389 = vector.broadcast %cst_70 : f32 to vector<8x128xf32>
    %390 = arith.select %321, %389, %388 : vector<8x128xi1>, vector<8x128xf32>
    %391 = arith.select %319, %299, %390 : vector<8x128xi1>, vector<8x128xf32>
    %392 = arith.mulf %357, %391 : vector<8x128xf32>
    %cst_71 = arith.constant 0.000000e+00 : f32
    %393 = vector.broadcast %cst_71 : f32 to vector<8x128xf32>
    %394 = arith.select %339, %393, %392 : vector<8x128xi1>, vector<8x128xf32>
    %c0_72 = arith.constant 0 : index
    %c3_73 = arith.constant 3 : index
    %c0_74 = arith.constant 0 : index
    %c0_75 = arith.constant 0 : index
    %395 = vector.load %arg3[%c0_72, %c3_73, %c0_74, %c0_75] : memref<1x12x8x128xf32, #tpu.memory_space<vmem>>, vector<1x1x8x128xf32>
    %396 = vector.shape_cast %395 : vector<1x1x8x128xf32> to vector<8x128xf32>
    %397 = vector.shape_cast %394 : vector<8x128xf32> to vector<1x1x8x128xf32>
    tpu.vector_store %arg3[%c0_72, %c3_73, %c0_74, %c0_75], %397 {strides = array<i32>} : memref<1x12x8x128xf32, #tpu.memory_space<vmem>>, vector<1x1x8x128xf32>,
    %c7_i32_76 = arith.constant 7 : i32
    %398 = tpu.dynamic_rotate %361 by %c7_i32_76 dim 0 : vector<8x128xf32>, i32 -> vector<8x128xf32>
    %cst_77 = arith.constant 0.000000e+00 : f32
    %399 = vector.broadcast %cst_77 : f32 to vector<8x128xf32>
    %400 = arith.select %325, %399, %398 : vector<8x128xi1>, vector<8x128xf32>
    %401 = arith.select %323, %361, %400 : vector<8x128xi1>, vector<8x128xf32>
    %402 = arith.mulf %401, %303 : vector<8x128xf32>
    %cst_78 = arith.constant 0.000000e+00 : f32
    %403 = vector.broadcast %cst_78 : f32 to vector<8x128xf32>
    %404 = arith.select %346, %403, %402 : vector<8x128xi1>, vector<8x128xf32>
    %c0_79 = arith.constant 0 : index
    %c4_80 = arith.constant 4 : index
    %c0_81 = arith.constant 0 : index
    %c0_82 = arith.constant 0 : index
    %405 = vector.load %arg3[%c0_79, %c4_80, %c0_81, %c0_82] : memref<1x12x8x128xf32, #tpu.memory_space<vmem>>, vector<1x1x8x128xf32>
    %406 = vector.shape_cast %405 : vector<1x1x8x128xf32> to vector<8x128xf32>
    %407 = vector.shape_cast %404 : vector<8x128xf32> to vector<1x1x8x128xf32>
    tpu.vector_store %arg3[%c0_79, %c4_80, %c0_81, %c0_82], %407 {strides = array<i32>} : memref<1x12x8x128xf32, #tpu.memory_space<vmem>>, vector<1x1x8x128xf32>,
    %c7_i32_83 = arith.constant 7 : i32
    %408 = tpu.dynamic_rotate %303 by %c7_i32_83 dim 0 : vector<8x128xf32>, i32 -> vector<8x128xf32>
    %cst_84 = arith.constant 0.000000e+00 : f32
    %409 = vector.broadcast %cst_84 : f32 to vector<8x128xf32>
    %410 = arith.select %325, %409, %408 : vector<8x128xi1>, vector<8x128xf32>
    %411 = arith.select %323, %303, %410 : vector<8x128xi1>, vector<8x128xf32>
    %412 = arith.mulf %411, %361 : vector<8x128xf32>
    %cst_85 = arith.constant 0.000000e+00 : f32
    %413 = vector.broadcast %cst_85 : f32 to vector<8x128xf32>
    %414 = arith.select %353, %413, %412 : vector<8x128xi1>, vector<8x128xf32>
    %c0_86 = arith.constant 0 : index
    %c5_87 = arith.constant 5 : index
    %c0_88 = arith.constant 0 : index
    %c0_89 = arith.constant 0 : index
    %415 = vector.load %arg3[%c0_86, %c5_87, %c0_88, %c0_89] : memref<1x12x8x128xf32, #tpu.memory_space<vmem>>, vector<1x1x8x128xf32>
    %416 = vector.shape_cast %415 : vector<1x1x8x128xf32> to vector<8x128xf32>
    %417 = vector.shape_cast %414 : vector<8x128xf32> to vector<1x1x8x128xf32>
    tpu.vector_store %arg3[%c0_86, %c5_87, %c0_88, %c0_89], %417 {strides = array<i32>} : memref<1x12x8x128xf32, #tpu.memory_space<vmem>>, vector<1x1x8x128xf32>,
    %c7_i32_90 = arith.constant 7 : i32
    %418 = tpu.dynamic_rotate %301 by %c7_i32_90 dim 0 : vector<8x128xf32>, i32 -> vector<8x128xf32>
    %cst_91 = arith.constant 0.000000e+00 : f32
    %419 = vector.broadcast %cst_91 : f32 to vector<8x128xf32>
    %420 = arith.select %325, %419, %418 : vector<8x128xi1>, vector<8x128xf32>
    %421 = arith.select %323, %301, %420 : vector<8x128xi1>, vector<8x128xf32>
    %c127_i32_92 = arith.constant 127 : i32
    %422 = tpu.dynamic_rotate %305 by %c127_i32_92 dim 1 : vector<8x128xf32>, i32 -> vector<8x128xf32>
    %cst_93 = arith.constant 0.000000e+00 : f32
    %423 = vector.broadcast %cst_93 : f32 to vector<8x128xf32>
    %424 = arith.select %321, %423, %422 : vector<8x128xi1>, vector<8x128xf32>
    %425 = arith.select %319, %305, %424 : vector<8x128xi1>, vector<8x128xf32>
    %426 = arith.mulf %421, %301 : vector<8x128xf32>
    %427 = arith.mulf %425, %305 : vector<8x128xf32>
    %cst_94 = arith.constant 2.000000e-02 : f32
    %428 = vector.broadcast %cst_94 : f32 to vector<8x128xf32>
    %429 = arith.cmpf ogt, %426, %428 : vector<8x128xf32>
    %cst_95 = arith.constant 0.000000e+00 : f32
    %430 = vector.broadcast %cst_95 : f32 to vector<8x128xf32>
    %431 = arith.select %429, %430, %427 : vector<8x128xi1>, vector<8x128xf32>
    %c0_96 = arith.constant 0 : index
    %c6_97 = arith.constant 6 : index
    %c0_98 = arith.constant 0 : index
    %c0_99 = arith.constant 0 : index
    %432 = vector.load %arg3[%c0_96, %c6_97, %c0_98, %c0_99] : memref<1x12x8x128xf32, #tpu.memory_space<vmem>>, vector<1x1x8x128xf32>
    %433 = vector.shape_cast %432 : vector<1x1x8x128xf32> to vector<8x128xf32>
    %434 = vector.shape_cast %431 : vector<8x128xf32> to vector<1x1x8x128xf32>
    tpu.vector_store %arg3[%c0_96, %c6_97, %c0_98, %c0_99], %434 {strides = array<i32>} : memref<1x12x8x128xf32, #tpu.memory_space<vmem>>, vector<1x1x8x128xf32>,
    %cst_100 = arith.constant 2.000000e-02 : f32
    %435 = vector.broadcast %cst_100 : f32 to vector<8x128xf32>
    %436 = arith.cmpf ogt, %427, %435 : vector<8x128xf32>
    %cst_101 = arith.constant 0.000000e+00 : f32
    %437 = vector.broadcast %cst_101 : f32 to vector<8x128xf32>
    %438 = arith.select %436, %437, %426 : vector<8x128xi1>, vector<8x128xf32>
    %c0_102 = arith.constant 0 : index
    %c8_103 = arith.constant 8 : index
    %c0_104 = arith.constant 0 : index
    %c0_105 = arith.constant 0 : index
    %439 = vector.load %arg3[%c0_102, %c8_103, %c0_104, %c0_105] : memref<1x12x8x128xf32, #tpu.memory_space<vmem>>, vector<1x1x8x128xf32>
    %440 = vector.shape_cast %439 : vector<1x1x8x128xf32> to vector<8x128xf32>
    %441 = vector.shape_cast %438 : vector<8x128xf32> to vector<1x1x8x128xf32>
    tpu.vector_store %arg3[%c0_102, %c8_103, %c0_104, %c0_105], %441 {strides = array<i32>} : memref<1x12x8x128xf32, #tpu.memory_space<vmem>>, vector<1x1x8x128xf32>,
    %c127_i32_106 = arith.constant 127 : i32
    %442 = tpu.dynamic_rotate %421 by %c127_i32_106 dim 1 : vector<8x128xf32>, i32 -> vector<8x128xf32>
    %cst_107 = arith.constant 0.000000e+00 : f32
    %443 = vector.broadcast %cst_107 : f32 to vector<8x128xf32>
    %444 = arith.select %321, %443, %442 : vector<8x128xi1>, vector<8x128xf32>
    %445 = arith.select %319, %421, %444 : vector<8x128xi1>, vector<8x128xf32>
    %446 = arith.mulf %445, %301 : vector<8x128xf32>
    %cst_108 = arith.constant 0.000000e+00 : f32
    %447 = vector.broadcast %cst_108 : f32 to vector<8x128xf32>
    %448 = arith.select %332, %447, %446 : vector<8x128xi1>, vector<8x128xf32>
    %c0_109 = arith.constant 0 : index
    %c7_110 = arith.constant 7 : index
    %c0_111 = arith.constant 0 : index
    %c0_112 = arith.constant 0 : index
    %449 = vector.load %arg3[%c0_109, %c7_110, %c0_111, %c0_112] : memref<1x12x8x128xf32, #tpu.memory_space<vmem>>, vector<1x1x8x128xf32>
    %450 = vector.shape_cast %449 : vector<1x1x8x128xf32> to vector<8x128xf32>
    %451 = vector.shape_cast %448 : vector<8x128xf32> to vector<1x1x8x128xf32>
    tpu.vector_store %arg3[%c0_109, %c7_110, %c0_111, %c0_112], %451 {strides = array<i32>} : memref<1x12x8x128xf32, #tpu.memory_space<vmem>>, vector<1x1x8x128xf32>,
    %c127_i32_113 = arith.constant 127 : i32
    %452 = tpu.dynamic_rotate %301 by %c127_i32_113 dim 1 : vector<8x128xf32>, i32 -> vector<8x128xf32>
    %cst_114 = arith.constant 0.000000e+00 : f32
    %453 = vector.broadcast %cst_114 : f32 to vector<8x128xf32>
    %454 = arith.select %321, %453, %452 : vector<8x128xi1>, vector<8x128xf32>
    %455 = arith.select %319, %301, %454 : vector<8x128xi1>, vector<8x128xf32>
    %456 = arith.mulf %421, %455 : vector<8x128xf32>
    %cst_115 = arith.constant 0.000000e+00 : f32
    %457 = vector.broadcast %cst_115 : f32 to vector<8x128xf32>
    %458 = arith.select %339, %457, %456 : vector<8x128xi1>, vector<8x128xf32>
    %c0_116 = arith.constant 0 : index
    %c9_117 = arith.constant 9 : index
    %c0_118 = arith.constant 0 : index
    %c0_119 = arith.constant 0 : index
    %459 = vector.load %arg3[%c0_116, %c9_117, %c0_118, %c0_119] : memref<1x12x8x128xf32, #tpu.memory_space<vmem>>, vector<1x1x8x128xf32>
    %460 = vector.shape_cast %459 : vector<1x1x8x128xf32> to vector<8x128xf32>
    %461 = vector.shape_cast %458 : vector<8x128xf32> to vector<1x1x8x128xf32>
    tpu.vector_store %arg3[%c0_116, %c9_117, %c0_118, %c0_119], %461 {strides = array<i32>} : memref<1x12x8x128xf32, #tpu.memory_space<vmem>>, vector<1x1x8x128xf32>,
    %c7_i32_120 = arith.constant 7 : i32
    %462 = tpu.dynamic_rotate %425 by %c7_i32_120 dim 0 : vector<8x128xf32>, i32 -> vector<8x128xf32>
    %cst_121 = arith.constant 0.000000e+00 : f32
    %463 = vector.broadcast %cst_121 : f32 to vector<8x128xf32>
    %464 = arith.select %325, %463, %462 : vector<8x128xi1>, vector<8x128xf32>
    %465 = arith.select %323, %425, %464 : vector<8x128xi1>, vector<8x128xf32>
    %466 = arith.mulf %465, %305 : vector<8x128xf32>
    %cst_122 = arith.constant 0.000000e+00 : f32
    %467 = vector.broadcast %cst_122 : f32 to vector<8x128xf32>
    %468 = arith.select %346, %467, %466 : vector<8x128xi1>, vector<8x128xf32>
    %c0_123 = arith.constant 0 : index
    %c10_124 = arith.constant 10 : index
    %c0_125 = arith.constant 0 : index
    %c0_126 = arith.constant 0 : index
    %469 = vector.load %arg3[%c0_123, %c10_124, %c0_125, %c0_126] : memref<1x12x8x128xf32, #tpu.memory_space<vmem>>, vector<1x1x8x128xf32>
    %470 = vector.shape_cast %469 : vector<1x1x8x128xf32> to vector<8x128xf32>
    %471 = vector.shape_cast %468 : vector<8x128xf32> to vector<1x1x8x128xf32>
    tpu.vector_store %arg3[%c0_123, %c10_124, %c0_125, %c0_126], %471 {strides = array<i32>} : memref<1x12x8x128xf32, #tpu.memory_space<vmem>>, vector<1x1x8x128xf32>,
    %c7_i32_127 = arith.constant 7 : i32
    %472 = tpu.dynamic_rotate %305 by %c7_i32_127 dim 0 : vector<8x128xf32>, i32 -> vector<8x128xf32>
    %cst_128 = arith.constant 0.000000e+00 : f32
    %473 = vector.broadcast %cst_128 : f32 to vector<8x128xf32>
    %474 = arith.select %325, %473, %472 : vector<8x128xi1>, vector<8x128xf32>
    %475 = arith.select %323, %305, %474 : vector<8x128xi1>, vector<8x128xf32>
    %476 = arith.mulf %475, %425 : vector<8x128xf32>
    %cst_129 = arith.constant 0.000000e+00 : f32
    %477 = vector.broadcast %cst_129 : f32 to vector<8x128xf32>
    %478 = arith.select %353, %477, %476 : vector<8x128xi1>, vector<8x128xf32>
    %c0_130 = arith.constant 0 : index
    %c11_131 = arith.constant 11 : index
    %c0_132 = arith.constant 0 : index
    %c0_133 = arith.constant 0 : index
    %479 = vector.load %arg3[%c0_130, %c11_131, %c0_132, %c0_133] : memref<1x12x8x128xf32, #tpu.memory_space<vmem>>, vector<1x1x8x128xf32>
    %480 = vector.shape_cast %479 : vector<1x1x8x128xf32> to vector<8x128xf32>
    %481 = vector.shape_cast %478 : vector<8x128xf32> to vector<1x1x8x128xf32>
    tpu.vector_store %arg3[%c0_130, %c11_131, %c0_132, %c0_133], %481 {strides = array<i32>} : memref<1x12x8x128xf32, #tpu.memory_space<vmem>>, vector<1x1x8x128xf32>,
    return
  }
  func.func @transform_0(%arg0: i32) -> (i32, i32, i32) {
    %c0_i32 = arith.constant 0 : i32
    %c0_i32_0 = arith.constant 0 : i32
    %c0_i32_1 = arith.constant 0 : i32
    return %arg0, %c0_i32, %c0_i32_0 : i32, i32, i32
  }
  func.func @transform_1(%arg0: i32) -> i32 {
    %c0_i32 = arith.constant 0 : i32
    %c0_i32_0 = arith.constant 0 : i32
    return %c0_i32 : i32
  }
  func.func @transform_2(%arg0: i32) -> (i32, i32, i32, i32) {
    %c0_i32 = arith.constant 0 : i32
    %c0_i32_0 = arith.constant 0 : i32
    %c0_i32_1 = arith.constant 0 : i32
    %c0_i32_2 = arith.constant 0 : i32
    return %arg0, %c0_i32, %c0_i32_0, %c0_i32_1 : i32, i32, i32, i32
  }
}

</mosaic_0001>

<llo_original>
// kernel: tpu_custom_call.1
$region0: #{tpu_custom_call.1}
  #allocation0 [shape = 'u32[]', space=smem, size = 0x4, offset = 0x4, fixed_abs, tag = 'smem constant byte address 0x4 - core index']
  #allocation1 [shape = 'u32[144,128]{1,0:T(1,128)}', space=vmem, size = 0x12000, scoped, tag = 'internal scratch']
  %s0 = inlined_call_operand.vmem [shape: f32[2,10,130], index: 0, kind: input, shape index: {}]
  %s1 = inlined_call_operand.vmem [shape: f32[72], index: 1, kind: input, shape index: {}]
  %s2 = inlined_call_operand.hbm [shape: f32[2,12,8,128], index: 2, kind: output, shape index: {}]
  %s3 = sld [smem:[#allocation0]]
  $region45: #{tpu_custom_call.1} parent=0
    _
  %s5 = ssub.s32 1, %s3
  %s6 = scalar_select 0, %s5, %s3
  $region1: #{tpu_custom_call.1} parent=0
    #allocation2 [shape = 'u8[512]{0}', space=smem, size = 0x200, scoped, tag = 'input window, operand 1, single buffered']
    #allocation3 [shape = 's32[2]{0}', space=sflag, size = 0x8, scoped, tag = 'scoped memory for tpu_custom_call.1']
    #allocation4 [shape = 's32[2]{0}', space=sflag, size = 0x8, scoped, tag = 'scoped memory for tpu_custom_call.1']
    #allocation5 [shape = 'u8[98304]{0}', space=vmem, size = 0x18000, scoped, tag = 'output window, operand 0']
    %7 = vsyncpa [#allocation4], 0
    %8 = vsyncpa [#allocation3], 0
    %s9 = scalar_lea.sflag [#allocation3], 1
    %10 = vsyncpa %s9, 0
    loop: start=0, step=1, limit=4
    $region2: #{tpu_custom_call.1} parent=1 // loop_pre_header
      _
    $region3: #{tpu_custom_call.1} parent=1 // loop_header
      %s12 = sphi 0, %s16
      %p13 = scmp.ge.s32.totalorder %s12, 4
      %s22 = sphi 0, %s24
      %s25 = sphi 0, %s22
      %s26 = sphi 0, %s25
      %s42 = sphi 0, %s26
      %s46 = sphi 0, %s46
      %s48 = sphi 0, %s46
      %s49 = sphi 0, %s48
      %s63 = sphi 0, %s49
      %s69 = sphi 0, %s71
      %s72 = sphi 0, %s69
      %s73 = sphi 0, %s72
      %s89 = sphi 0, %s73
    $region4: #{tpu_custom_call.1} parent=1 // loop_header_branch
      %15 = sbr.rel (%p13) target = $region8
    $region5: #{tpu_custom_call.1} parent=1 // loop_body
      %s17 = ssub.s32 %s12, 1
      %s18 = ssub.s32 %s12, 2
      %s19 = sadd.s32 %s12, 1
      %s20 = ssub.s32 %s12, %s19
      %p21 = scmp.eq.s32.totalorder %s20, 0
      %s23 = sadd.s32 %s22, 1
      %s24 = scalar_select %p21, %s22, %s23
      %p27 = pneg %p21
      %p28 = scmp.eq.s32.totalorder %s12, 1
      %p29 = por %p27, %p28
      %p30 = scmp.ne.s32.totalorder %s22, %s25
      %p31 = scmp.eq.s32.totalorder %s12, 0
      %p32 = por %p30, %p31
      %p33 = scmp.ne.s32.totalorder %s22, %s25
      %p34 = scmp.eq.s32.totalorder %s17, 1
      %p35 = por %p33, %p34
      %p36 = scmp.ne.s32.totalorder %s25, %s26
      %p37 = scmp.eq.s32.totalorder %s17, 0
      %p38 = por %p36, %p37
      %p39 = scmp.ne.s32.totalorder %s25, %s26
      %p40 = scmp.eq.s32.totalorder %s18, 1
      %p41 = por %p39, %p40
      %p43 = scmp.ne.s32.totalorder %s26, %s42
      %p44 = scmp.eq.s32.totalorder %s18, 0
      %p45 = por %p43, %p44
      %s47 = sadd.s32 %s46, 1
      %p50 = scmp.eq.s32.totalorder %s12, 1
      %p51 = scmp.ne.s32.totalorder %s46, %s48
      %p52 = scmp.eq.s32.totalorder %s12, 0
      %p53 = por %p51, %p52
      %p54 = scmp.ne.s32.totalorder %s46, %s48
      %p55 = scmp.eq.s32.totalorder %s17, 1
      %p56 = por %p54, %p55
      %p57 = scmp.ne.s32.totalorder %s48, %s49
      %p58 = scmp.eq.s32.totalorder %s17, 0
      %p59 = por %p57, %p58
      %p60 = scmp.ne.s32.totalorder %s48, %s49
      %p61 = scmp.eq.s32.totalorder %s18, 1
      %p62 = por %p60, %p61
      %p64 = scmp.ne.s32.totalorder %s49, %s63
      %p65 = scmp.eq.s32.totalorder %s18, 0
      %p66 = por %p64, %p65
      %s67 = ssub.s32 %s12, %s19
      %p68 = scmp.eq.s32.totalorder %s67, 0
      %s70 = sadd.s32 %s69, 1
      %s71 = scalar_select %p68, %s69, %s70
      %p74 = pneg %p68
      %p75 = scmp.eq.s32.totalorder %s12, 1
      %p76 = por %p74, %p75
      %p77 = scmp.ne.s32.totalorder %s69, %s72
      %p78 = scmp.eq.s32.totalorder %s12, 0
      %p79 = por %p77, %p78
      %p80 = scmp.ne.s32.totalorder %s69, %s72
      %p81 = scmp.eq.s32.totalorder %s17, 1
      %p82 = por %p80, %p81
      %p83 = scmp.ne.s32.totalorder %s72, %s73
      %p84 = scmp.eq.s32.totalorder %s17, 0
      %p85 = por %p83, %p84
      %p86 = scmp.ne.s32.totalorder %s72, %s73
      %p87 = scmp.eq.s32.totalorder %s18, 1
      %p88 = por %p86, %p87
      %p90 = scmp.ne.s32.totalorder %s73, %s89
      %p91 = scmp.eq.s32.totalorder %s18, 0
      %p92 = por %p90, %p91
      %p93 = scmp.le.s32.totalorder 1, %s12
      %p94 = scmp.lt.s32.totalorder %s12, 3
      %p95 = pnand %p93, %p94
      %p96 = pneg %p95
      // Predicated region
      $region9: #{tpu_custom_call.1} parent=5 // pred_check
        _
      $region10: #{tpu_custom_call.1} parent=5 // pred_check_branch
        %98 = sbr.rel (%p95) target = $region12
      $region11: #{tpu_custom_call.1} parent=5 // pred_region
        %s99 = ssub.s32 %s12, 1
        // Predicated region
        $region13: #{tpu_custom_call.1} parent=11 // pred_check
          %p100 = pneg %p59
        $region14: #{tpu_custom_call.1} parent=11 // pred_check_branch
          %102 = sbr.rel (%p100) target = $region16
        $region15: #{tpu_custom_call.1} parent=11 // pred_region
          %s104 = ssub.s32 16, 16
          %105 = vsyncadd [#allocation4], %s104
          %s107 = sshll.u32 %s1, 4
          %s108 = int_to_ptr.vmem [resolvable:$true] %s107
          %110 = dma.vmem_to_smem %s108, 16, [#allocation2], [#allocation4]
        $region16: #{tpu_custom_call.1} parent=11 // pred_fallthru
          _
      $region12: #{tpu_custom_call.1} parent=5 // pred_fallthru
        _
      %p111 = scmp.lt.s32.totalorder %s12, 2
      // Predicated region
      $region17: #{tpu_custom_call.1} parent=5 // pred_check
        %p112 = pneg %p111
      $region18: #{tpu_custom_call.1} parent=5 // pred_check_branch
        %114 = sbr.rel (%p112) target = $region20
      $region19: #{tpu_custom_call.1} parent=5 // pred_region
        // Predicated region
        $region21: #{tpu_custom_call.1} parent=19 // pred_check
          %p115 = pneg %p32
        $region22: #{tpu_custom_call.1} parent=19 // pred_check_branch
          %117 = sbr.rel (%p115) target = $region24
        $region23: #{tpu_custom_call.1} parent=19 // pred_region
          %p118 = scmp.lt.s32.totalorder %s12, 1
          %s119 = scalar_select %p118, %s12, 1
          %s120 = smul.addr %s119, 4
          %s121 = smul.addr %s120, 8
          %s122 = scalar_lea.vmem %s0, %s121
        $region24: #{tpu_custom_call.1} parent=19 // pred_fallthru
          _
      $region20: #{tpu_custom_call.1} parent=5 // pred_fallthru
        _
      %p123 = scmp.le.s32.totalorder 1, %s12
      %p124 = scmp.lt.s32.totalorder %s12, 3
      %p125 = pnand %p123, %p124
      %p126 = pneg %p125
      // Predicated region
      $region25: #{tpu_custom_call.1} parent=5 // pred_check
        _
      $region26: #{tpu_custom_call.1} parent=5 // pred_check_branch
        %128 = sbr.rel (%p125) target = $region28
      $region27: #{tpu_custom_call.1} parent=5 // pred_region
        %s129 = ssub.s32 %s12, 1
        // Predicated region
        $region29: #{tpu_custom_call.1} parent=27 // pred_check
          %p130 = pneg %p59
        $region30: #{tpu_custom_call.1} parent=27 // pred_check_branch
          %132 = sbr.rel (%p130) target = $region32
        $region31: #{tpu_custom_call.1} parent=27 // pred_region
          %133 = dma.done [#allocation4], 16
        $region32: #{tpu_custom_call.1} parent=27 // pred_fallthru
          _
        %134 = sfence
        %p135 = scmp.lt.s32.totalorder %s17, 1
        %s136 = scalar_select %p135, %s17, 1
        %s137 = smul.addr %s136, 4
        %s138 = smul.addr %s137, 8
        %s139 = scalar_lea.vmem %s0, %s138
        %p140 = pneg %p38
        %p141 = pneg %p35
        %p142 = pneg %p59
        %p143 = pneg %p56
        %p144 = pneg %p85
        %p145 = pneg %p82
        %s146 = sand.u32 %s72, 1
        %s147 = scalar_lea.sflag [#allocation3], %s146
        %s148 = sand.u32 %s72, 1
        %s149 = smul.addr %s148, 96
        %s150 = scalar_lea.vmem [#allocation5], %s149
        %p151 = scmp.lt.s32.totalorder %s17, 1
        %s152 = scalar_select %p151, %s17, 1
        %s153 = smul.addr %s152, 4
        %s154 = smul.addr %s153, 8
        %s155 = scalar_lea.vmem %s0, %s154
        %s156 = sld [smem:[#allocation2]]
        %s157 = sld [smem:[#allocation2 + $0x1]]
        %s158 = sld [smem:[#allocation2 + $0x2]]
        %s159 = sld [smem:[#allocation2 + $0x3]]
        %s160 = sld [smem:[#allocation2 + $0x4]]
        %s161 = sld [smem:[#allocation2 + $0x5]]
        %s162 = sld [smem:[#allocation2 + $0x6]]
        %s163 = sld [smem:[#allocation2 + $0x7]]
        %s164 = sld [smem:[#allocation2 + $0x8]]
        %s165 = sld [smem:[#allocation2 + $0x9]]
        %s166 = sld [smem:[#allocation2 + $0xa]]
        %s167 = sld [smem:[#allocation2 + $0xb]]
        %s168 = sld [smem:[#allocation2 + $0xc]]
        %s169 = sld [smem:[#allocation2 + $0xd]]
        %s170 = sld [smem:[#allocation2 + $0xe]]
        %s171 = sld [smem:[#allocation2 + $0xf]]
        %s172 = sld [smem:[#allocation2 + $0x10]]
        %s173 = sld [smem:[#allocation2 + $0x11]]
        %s174 = sld [smem:[#allocation2 + $0x12]]
        %s175 = sld [smem:[#allocation2 + $0x13]]
        %s176 = sld [smem:[#allocation2 + $0x14]]
        %s177 = sld [smem:[#allocation2 + $0x15]]
        %s178 = sld [smem:[#allocation2 + $0x16]]
        %s179 = sld [smem:[#allocation2 + $0x17]]
        %s180 = sld [smem:[#allocation2 + $0x18]]
        %s181 = sld [smem:[#allocation2 + $0x19]]
        %s182 = sld [smem:[#allocation2 + $0x1a]]
        %s183 = sld [smem:[#allocation2 + $0x1b]]
        %s184 = sld [smem:[#allocation2 + $0x1c]]
        %s185 = sld [smem:[#allocation2 + $0x1d]]
        %s186 = sld [smem:[#allocation2 + $0x1e]]
        %s187 = sld [smem:[#allocation2 + $0x1f]]
        %s188 = sld [smem:[#allocation2 + $0x20]]
        %s189 = sld [smem:[#allocation2 + $0x21]]
        %s190 = sld [smem:[#allocation2 + $0x22]]
        %s191 = sld [smem:[#allocation2 + $0x23]]
        %s192 = sld [smem:[#allocation2 + $0x24]]
        %s193 = sld [smem:[#allocation2 + $0x25]]
        %s194 = sld [smem:[#allocation2 + $0x26]]
        %s195 = sld [smem:[#allocation2 + $0x27]]
        %s196 = sld [smem:[#allocation2 + $0x28]]
        %s197 = sld [smem:[#allocation2 + $0x29]]
        %s198 = sld [smem:[#allocation2 + $0x2a]]
        %s199 = sld [smem:[#allocation2 + $0x2b]]
        %s200 = sld [smem:[#allocation2 + $0x2c]]
        %s201 = sld [smem:[#allocation2 + $0x2d]]
        %s202 = sld [smem:[#allocation2 + $0x2e]]
        %s203 = sld [smem:[#allocation2 + $0x2f]]
        %s204 = sld [smem:[#allocation2 + $0x30]]
        %s205 = sld [smem:[#allocation2 + $0x31]]
        %s206 = sld [smem:[#allocation2 + $0x32]]
        %s207 = sld [smem:[#allocation2 + $0x33]]
        %s208 = sld [smem:[#allocation2 + $0x34]]
        %s209 = sld [smem:[#allocation2 + $0x35]]
        %s210 = sld [smem:[#allocation2 + $0x36]]
        %s211 = sld [smem:[#allocation2 + $0x37]]
        %s212 = sld [smem:[#allocation2 + $0x38]]
        %s213 = sld [smem:[#allocation2 + $0x39]]
        %s214 = sld [smem:[#allocation2 + $0x3a]]
        %s215 = sld [smem:[#allocation2 + $0x3b]]
        %s216 = sld [smem:[#allocation2 + $0x3c]]
        %s217 = sld [smem:[#allocation2 + $0x3d]]
        %s218 = sld [smem:[#allocation2 + $0x3e]]
        %s219 = sld [smem:[#allocation2 + $0x3f]]
        %s220 = sld [smem:[#allocation2 + $0x40]]
        %s221 = sld [smem:[#allocation2 + $0x41]]
        %s222 = sld [smem:[#allocation2 + $0x42]]
        %s223 = sld [smem:[#allocation2 + $0x43]]
        %s224 = sld [smem:[#allocation2 + $0x44]]
        %s225 = sld [smem:[#allocation2 + $0x45]]
        %s226 = sld [smem:[#allocation2 + $0x46]]
        %s227 = sld [smem:[#allocation2 + $0x47]]
        %v228 = vld [vmem:[%s155] sm:$0xff]
        %v229 = vstv %s156
        %v230 = vmul.f32 %v229, %v228
        %v231 = vstv %s165
        %v232 = vmul.f32 %v231, %v228
        %v233 = vstv %s174
        %v234 = vmul.f32 %v233, %v228
        %v235 = vstv %s183
        %v236 = vmul.f32 %v235, %v228
        %v237 = vstv %s192
        %v238 = vmul.f32 %v237, %v228
        %v239 = vstv %s201
        %v240 = vmul.f32 %v239, %v228
        %v241 = vstv %s210
        %v242 = vmul.f32 %v241, %v228
        %v243 = vstv %s219
        %v244 = vmul.f32 %v243, %v228
        %v245 = vld [vmem:[%s155 + $0x8] sm:$0xff]
        %v246 = vstv %s157
        %v247 = vmul.f32 %v246, %v228
        %v248 = vmul.f32 %v246, %v245
        %251 = vrot.lane.b32.xlu0 %v247, 127
        %v252 = vpop.permute.xlu0 %251
        %253 = vrot.lane.b32.xlu0 %v248, 127
        %v254 = vpop.permute.xlu0 %253
        %vm255 = vcmask 1039360
        %v256 = vsel %vm255, %v252, %v254
        %v258 = vadd.f32 %v230, %v256
        %v259 = vstv %s166
        %v260 = vmul.f32 %v259, %v228
        %v261 = vmul.f32 %v259, %v245
        %264 = vrot.lane.b32.xlu0 %v260, 127
        %v265 = vpop.permute.xlu0 %264
        %266 = vrot.lane.b32.xlu0 %v261, 127
        %v267 = vpop.permute.xlu0 %266
        %v268 = vsel %vm255, %v265, %v267
        %v270 = vadd.f32 %v232, %v268
        %v271 = vstv %s175
        %v272 = vmul.f32 %v271, %v228
        %v273 = vmul.f32 %v271, %v245
        %276 = vrot.lane.b32.xlu0 %v272, 127
        %v277 = vpop.permute.xlu0 %276
        %278 = vrot.lane.b32.xlu0 %v273, 127
        %v279 = vpop.permute.xlu0 %278
        %v280 = vsel %vm255, %v277, %v279
        %v282 = vadd.f32 %v234, %v280
        %v283 = vstv %s184
        %v284 = vmul.f32 %v283, %v228
        %v285 = vmul.f32 %v283, %v245
        %288 = vrot.lane.b32.xlu0 %v284, 127
        %v289 = vpop.permute.xlu0 %288
        %290 = vrot.lane.b32.xlu0 %v285, 127
        %v291 = vpop.permute.xlu0 %290
        %v292 = vsel %vm255, %v289, %v291
        %v294 = vadd.f32 %v236, %v292
        %v295 = vstv %s193
        %v296 = vmul.f32 %v295, %v228
        %v297 = vmul.f32 %v295, %v245
        %300 = vrot.lane.b32.xlu0 %v296, 127
        %v301 = vpop.permute.xlu0 %300
        %302 = vrot.lane.b32.xlu0 %v297, 127
        %v303 = vpop.permute.xlu0 %302
        %v304 = vsel %vm255, %v301, %v303
        %v306 = vadd.f32 %v238, %v304
        %v307 = vstv %s202
        %v308 = vmul.f32 %v307, %v228
        %v309 = vmul.f32 %v307, %v245
        %312 = vrot.lane.b32.xlu0 %v308, 127
        %v313 = vpop.permute.xlu0 %312
        %314 = vrot.lane.b32.xlu0 %v309, 127
        %v315 = vpop.permute.xlu0 %314
        %v316 = vsel %vm255, %v313, %v315
        %v318 = vadd.f32 %v240, %v316
        %v319 = vstv %s211
        %v320 = vmul.f32 %v319, %v228
        %v321 = vmul.f32 %v319, %v245
        %324 = vrot.lane.b32.xlu0 %v320, 127
        %v325 = vpop.permute.xlu0 %324
        %326 = vrot.lane.b32.xlu0 %v321, 127
        %v327 = vpop.permute.xlu0 %326
        %v328 = vsel %vm255, %v325, %v327
        %v330 = vadd.f32 %v242, %v328
        %v331 = vstv %s220
        %v332 = vmul.f32 %v331, %v228
        %v333 = vmul.f32 %v331, %v245
        %336 = vrot.lane.b32.xlu0 %v332, 127
        %v337 = vpop.permute.xlu0 %336
        %338 = vrot.lane.b32.xlu0 %v333, 127
        %v339 = vpop.permute.xlu0 %338
        %v340 = vsel %vm255, %v337, %v339
        %v342 = vadd.f32 %v244, %v340
        %v343 = vstv %s158
        %v344 = vmul.f32 %v343, %v228
        %v345 = vmul.f32 %v343, %v245
        %348 = vrot.lane.b32.xlu0 %v344, 126
        %v349 = vpop.permute.xlu0 %348
        %350 = vrot.lane.b32.xlu0 %v345, 126
        %v351 = vpop.permute.xlu0 %350
        %vm352 = vcmask 1031168
        %v353 = vsel %vm352, %v349, %v351
        %v355 = vadd.f32 %v258, %v353
        %v356 = vstv %s167
        %v357 = vmul.f32 %v356, %v228
        %v358 = vmul.f32 %v356, %v245
        %361 = vrot.lane.b32.xlu0 %v357, 126
        %v362 = vpop.permute.xlu0 %361
        %363 = vrot.lane.b32.xlu0 %v358, 126
        %v364 = vpop.permute.xlu0 %363
        %v365 = vsel %vm352, %v362, %v364
        %v367 = vadd.f32 %v270, %v365
        %v368 = vstv %s176
        %v369 = vmul.f32 %v368, %v228
        %v370 = vmul.f32 %v368, %v245
        %373 = vrot.lane.b32.xlu0 %v369, 126
        %v374 = vpop.permute.xlu0 %373
        %375 = vrot.lane.b32.xlu0 %v370, 126
        %v376 = vpop.permute.xlu0 %375
        %v377 = vsel %vm352, %v374, %v376
        %v379 = vadd.f32 %v282, %v377
        %v380 = vstv %s185
        %v381 = vmul.f32 %v380, %v228
        %v382 = vmul.f32 %v380, %v245
        %385 = vrot.lane.b32.xlu0 %v381, 126
        %v386 = vpop.permute.xlu0 %385
        %387 = vrot.lane.b32.xlu0 %v382, 126
        %v388 = vpop.permute.xlu0 %387
        %v389 = vsel %vm352, %v386, %v388
        %v391 = vadd.f32 %v294, %v389
        %v392 = vstv %s194
        %v393 = vmul.f32 %v392, %v228
        %v394 = vmul.f32 %v392, %v245
        %397 = vrot.lane.b32.xlu0 %v393, 126
        %v398 = vpop.permute.xlu0 %397
        %399 = vrot.lane.b32.xlu0 %v394, 126
        %v400 = vpop.permute.xlu0 %399
        %v401 = vsel %vm352, %v398, %v400
        %v403 = vadd.f32 %v306, %v401
        %v404 = vstv %s203
        %v405 = vmul.f32 %v404, %v228
        %v406 = vmul.f32 %v404, %v245
        %409 = vrot.lane.b32.xlu0 %v405, 126
        %v410 = vpop.permute.xlu0 %409
        %411 = vrot.lane.b32.xlu0 %v406, 126
        %v412 = vpop.permute.xlu0 %411
        %v413 = vsel %vm352, %v410, %v412
        %v415 = vadd.f32 %v318, %v413
        %v416 = vstv %s212
        %v417 = vmul.f32 %v416, %v228
        %v418 = vmul.f32 %v416, %v245
        %421 = vrot.lane.b32.xlu0 %v417, 126
        %v422 = vpop.permute.xlu0 %421
        %423 = vrot.lane.b32.xlu0 %v418, 126
        %v424 = vpop.permute.xlu0 %423
        %v425 = vsel %vm352, %v422, %v424
        %v427 = vadd.f32 %v330, %v425
        %v428 = vstv %s221
        %v429 = vmul.f32 %v428, %v228
        %v430 = vmul.f32 %v428, %v245
        %433 = vrot.lane.b32.xlu0 %v429, 126
        %v434 = vpop.permute.xlu0 %433
        %435 = vrot.lane.b32.xlu0 %v430, 126
        %v436 = vpop.permute.xlu0 %435
        %v437 = vsel %vm352, %v434, %v436
        %v439 = vadd.f32 %v342, %v437
        %v440 = vld [vmem:[%s155] sm:$0xfe]
        %v441 = vld [vmem:[%s155 + $0x10] sm:$0x1]
        %v442 = vstv %s159
        %v443 = vmul.f32 %v442, %v440
        %v444 = vmul.f32 %v442, %v441
        %vm447 = vcmask 1046528
        %v448 = vrot.slane %v443, 1
        %v449 = vrot.slane %v444, 1
        %v450 = vsel %vm447, %v448, %v449
        %v452 = vadd.f32 %v355, %v450
        %v453 = vstv %s168
        %v454 = vmul.f32 %v453, %v440
        %v455 = vmul.f32 %v453, %v441
        %v458 = vrot.slane %v454, 1
        %v459 = vrot.slane %v455, 1
        %v460 = vsel %vm447, %v458, %v459
        %v462 = vadd.f32 %v367, %v460
        %v463 = vstv %s177
        %v464 = vmul.f32 %v463, %v440
        %v465 = vmul.f32 %v463, %v441
        %v468 = vrot.slane %v464, 1
        %v469 = vrot.slane %v465, 1
        %v470 = vsel %vm447, %v468, %v469
        %v472 = vadd.f32 %v379, %v470
        %v473 = vstv %s186
        %v474 = vmul.f32 %v473, %v440
        %v475 = vmul.f32 %v473, %v441
        %v478 = vrot.slane %v474, 1
        %v479 = vrot.slane %v475, 1
        %v480 = vsel %vm447, %v478, %v479
        %v482 = vadd.f32 %v391, %v480
        %v483 = vstv %s195
        %v484 = vmul.f32 %v483, %v440
        %v485 = vmul.f32 %v483, %v441
        %v488 = vrot.slane %v484, 1
        %v489 = vrot.slane %v485, 1
        %v490 = vsel %vm447, %v488, %v489
        %v492 = vadd.f32 %v403, %v490
        %v493 = vstv %s204
        %v494 = vmul.f32 %v493, %v440
        %v495 = vmul.f32 %v493, %v441
        %v498 = vrot.slane %v494, 1
        %v499 = vrot.slane %v495, 1
        %v500 = vsel %vm447, %v498, %v499
        %v502 = vadd.f32 %v415, %v500
        %v503 = vstv %s213
        %v504 = vmul.f32 %v503, %v440
        %v505 = vmul.f32 %v503, %v441
        %v508 = vrot.slane %v504, 1
        %v509 = vrot.slane %v505, 1
        %v510 = vsel %vm447, %v508, %v509
        %v512 = vadd.f32 %v427, %v510
        %v513 = vstv %s222
        %v514 = vmul.f32 %v513, %v440
        %v515 = vmul.f32 %v513, %v441
        %v518 = vrot.slane %v514, 1
        %v519 = vrot.slane %v515, 1
        %v520 = vsel %vm447, %v518, %v519
        %v522 = vadd.f32 %v439, %v520
        %v523 = vld [vmem:[%s155 + $0x8] sm:$0xfe]
        %v524 = vld [vmem:[%s155 + $0x18] sm:$0x1]
        %v525 = vstv %s160
        %v526 = vmul.f32 %v525, %v440
        %v527 = vmul.f32 %v525, %v523
        %v528 = vmul.f32 %v525, %v441
        %v529 = vmul.f32 %v525, %v524
        %v534 = vrot.slane %v526, 1
        %v535 = vrot.slane %v528, 1
        %v536 = vsel %vm447, %v534, %v535
        %v537 = vrot.slane %v527, 1
        %v538 = vrot.slane %v529, 1
        %v539 = vsel %vm447, %v537, %v538
        %540 = vrot.lane.b32.xlu0 %v536, 127
        %v541 = vpop.permute.xlu0 %540
        %542 = vrot.lane.b32.xlu0 %v539, 127
        %v543 = vpop.permute.xlu0 %542
        %v544 = vsel %vm255, %v541, %v543
        %v546 = vadd.f32 %v452, %v544
        %v547 = vstv %s169
        %v548 = vmul.f32 %v547, %v440
        %v549 = vmul.f32 %v547, %v523
        %v550 = vmul.f32 %v547, %v441
        %v551 = vmul.f32 %v547, %v524
        %v556 = vrot.slane %v548, 1
        %v557 = vrot.slane %v550, 1
        %v558 = vsel %vm447, %v556, %v557
        %v559 = vrot.slane %v549, 1
        %v560 = vrot.slane %v551, 1
        %v561 = vsel %vm447, %v559, %v560
        %562 = vrot.lane.b32.xlu0 %v558, 127
        %v563 = vpop.permute.xlu0 %562
        %564 = vrot.lane.b32.xlu0 %v561, 127
        %v565 = vpop.permute.xlu0 %564
        %v566 = vsel %vm255, %v563, %v565
        %v568 = vadd.f32 %v462, %v566
        %v569 = vstv %s178
        %v570 = vmul.f32 %v569, %v440
        %v571 = vmul.f32 %v569, %v523
        %v572 = vmul.f32 %v569, %v441
        %v573 = vmul.f32 %v569, %v524
        %v578 = vrot.slane %v570, 1
        %v579 = vrot.slane %v572, 1
        %v580 = vsel %vm447, %v578, %v579
        %v581 = vrot.slane %v571, 1
        %v582 = vrot.slane %v573, 1
        %v583 = vsel %vm447, %v581, %v582
        %584 = vrot.lane.b32.xlu0 %v580, 127
        %v585 = vpop.permute.xlu0 %584
        %586 = vrot.lane.b32.xlu0 %v583, 127
        %v587 = vpop.permute.xlu0 %586
        %v588 = vsel %vm255, %v585, %v587
        %v590 = vadd.f32 %v472, %v588
        %v591 = vstv %s187
        %v592 = vmul.f32 %v591, %v440
        %v593 = vmul.f32 %v591, %v523
        %v594 = vmul.f32 %v591, %v441
        %v595 = vmul.f32 %v591, %v524
        %v600 = vrot.slane %v592, 1
        %v601 = vrot.slane %v594, 1
        %v602 = vsel %vm447, %v600, %v601
        %v603 = vrot.slane %v593, 1
        %v604 = vrot.slane %v595, 1
        %v605 = vsel %vm447, %v603, %v604
        %606 = vrot.lane.b32.xlu0 %v602, 127
        %v607 = vpop.permute.xlu0 %606
        %608 = vrot.lane.b32.xlu0 %v605, 127
        %v609 = vpop.permute.xlu0 %608
        %v610 = vsel %vm255, %v607, %v609
        %v612 = vadd.f32 %v482, %v610
        %v613 = vstv %s196
        %v614 = vmul.f32 %v613, %v440
        %v615 = vmul.f32 %v613, %v523
        %v616 = vmul.f32 %v613, %v441
        %v617 = vmul.f32 %v613, %v524
        %v622 = vrot.slane %v614, 1
        %v623 = vrot.slane %v616, 1
        %v624 = vsel %vm447, %v622, %v623
        %v625 = vrot.slane %v615, 1
        %v626 = vrot.slane %v617, 1
        %v627 = vsel %vm447, %v625, %v626
        %628 = vrot.lane.b32.xlu0 %v624, 127
        %v629 = vpop.permute.xlu0 %628
        %630 = vrot.lane.b32.xlu0 %v627, 127
        %v631 = vpop.permute.xlu0 %630
        %v632 = vsel %vm255, %v629, %v631
        %v634 = vadd.f32 %v492, %v632
        %v635 = vstv %s205
        %v636 = vmul.f32 %v635, %v440
        %v637 = vmul.f32 %v635, %v523
        %v638 = vmul.f32 %v635, %v441
        %v639 = vmul.f32 %v635, %v524
        %v644 = vrot.slane %v636, 1
        %v645 = vrot.slane %v638, 1
        %v646 = vsel %vm447, %v644, %v645
        %v647 = vrot.slane %v637, 1
        %v648 = vrot.slane %v639, 1
        %v649 = vsel %vm447, %v647, %v648
        %650 = vrot.lane.b32.xlu0 %v646, 127
        %v651 = vpop.permute.xlu0 %650
        %652 = vrot.lane.b32.xlu0 %v649, 127
        %v653 = vpop.permute.xlu0 %652
        %v654 = vsel %vm255, %v651, %v653
        %v656 = vadd.f32 %v502, %v654
        %v657 = vstv %s214
        %v658 = vmul.f32 %v657, %v440
        %v659 = vmul.f32 %v657, %v523
        %v660 = vmul.f32 %v657, %v441
        %v661 = vmul.f32 %v657, %v524
        %v666 = vrot.slane %v658, 1
        %v667 = vrot.slane %v660, 1
        %v668 = vsel %vm447, %v666, %v667
        %v669 = vrot.slane %v659, 1
        %v670 = vrot.slane %v661, 1
        %v671 = vsel %vm447, %v669, %v670
        %672 = vrot.lane.b32.xlu0 %v668, 127
        %v673 = vpop.permute.xlu0 %672
        %674 = vrot.lane.b32.xlu0 %v671, 127
        %v675 = vpop.permute.xlu0 %674
        %v676 = vsel %vm255, %v673, %v675
        %v678 = vadd.f32 %v512, %v676
        %v679 = vstv %s223
        %v680 = vmul.f32 %v679, %v440
        %v681 = vmul.f32 %v679, %v523
        %v682 = vmul.f32 %v679, %v441
        %v683 = vmul.f32 %v679, %v524
        %v688 = vrot.slane %v680, 1
        %v689 = vrot.slane %v682, 1
        %v690 = vsel %vm447, %v688, %v689
        %v691 = vrot.slane %v681, 1
        %v692 = vrot.slane %v683, 1
        %v693 = vsel %vm447, %v691, %v692
        %694 = vrot.lane.b32.xlu0 %v690, 127
        %v695 = vpop.permute.xlu0 %694
        %696 = vrot.lane.b32.xlu0 %v693, 127
        %v697 = vpop.permute.xlu0 %696
        %v698 = vsel %vm255, %v695, %v697
        %v700 = vadd.f32 %v522, %v698
        %v701 = vstv %s161
        %v702 = vmul.f32 %v701, %v440
        %v703 = vmul.f32 %v701, %v523
        %v704 = vmul.f32 %v701, %v441
        %v705 = vmul.f32 %v701, %v524
        %v710 = vrot.slane %v702, 1
        %v711 = vrot.slane %v704, 1
        %v712 = vsel %vm447, %v710, %v711
        %v713 = vrot.slane %v703, 1
        %v714 = vrot.slane %v705, 1
        %v715 = vsel %vm447, %v713, %v714
        %716 = vrot.lane.b32.xlu0 %v712, 126
        %v717 = vpop.permute.xlu0 %716
        %718 = vrot.lane.b32.xlu0 %v715, 126
        %v719 = vpop.permute.xlu0 %718
        %v720 = vsel %vm352, %v717, %v719
        %v722 = vadd.f32 %v546, %v720
        %v723 = vstv %s170
        %v724 = vmul.f32 %v723, %v440
        %v725 = vmul.f32 %v723, %v523
        %v726 = vmul.f32 %v723, %v441
        %v727 = vmul.f32 %v723, %v524
        %v732 = vrot.slane %v724, 1
        %v733 = vrot.slane %v726, 1
        %v734 = vsel %vm447, %v732, %v733
        %v735 = vrot.slane %v725, 1
        %v736 = vrot.slane %v727, 1
        %v737 = vsel %vm447, %v735, %v736
        %738 = vrot.lane.b32.xlu0 %v734, 126
        %v739 = vpop.permute.xlu0 %738
        %740 = vrot.lane.b32.xlu0 %v737, 126
        %v741 = vpop.permute.xlu0 %740
        %v742 = vsel %vm352, %v739, %v741
        %v744 = vadd.f32 %v568, %v742
        %v745 = vstv %s179
        %v746 = vmul.f32 %v745, %v440
        %v747 = vmul.f32 %v745, %v523
        %v748 = vmul.f32 %v745, %v441
        %v749 = vmul.f32 %v745, %v524
        %v754 = vrot.slane %v746, 1
        %v755 = vrot.slane %v748, 1
        %v756 = vsel %vm447, %v754, %v755
        %v757 = vrot.slane %v747, 1
        %v758 = vrot.slane %v749, 1
        %v759 = vsel %vm447, %v757, %v758
        %760 = vrot.lane.b32.xlu0 %v756, 126
        %v761 = vpop.permute.xlu0 %760
        %762 = vrot.lane.b32.xlu0 %v759, 126
        %v763 = vpop.permute.xlu0 %762
        %v764 = vsel %vm352, %v761, %v763
        %v766 = vadd.f32 %v590, %v764
        %v767 = vstv %s188
        %v768 = vmul.f32 %v767, %v440
        %v769 = vmul.f32 %v767, %v523
        %v770 = vmul.f32 %v767, %v441
        %v771 = vmul.f32 %v767, %v524
        %v776 = vrot.slane %v768, 1
        %v777 = vrot.slane %v770, 1
        %v778 = vsel %vm447, %v776, %v777
        %v779 = vrot.slane %v769, 1
        %v780 = vrot.slane %v771, 1
        %v781 = vsel %vm447, %v779, %v780
        %782 = vrot.lane.b32.xlu0 %v778, 126
        %v783 = vpop.permute.xlu0 %782
        %784 = vrot.lane.b32.xlu0 %v781, 126
        %v785 = vpop.permute.xlu0 %784
        %v786 = vsel %vm352, %v783, %v785
        %v788 = vadd.f32 %v612, %v786
        %v789 = vstv %s197
        %v790 = vmul.f32 %v789, %v440
        %v791 = vmul.f32 %v789, %v523
        %v792 = vmul.f32 %v789, %v441
        %v793 = vmul.f32 %v789, %v524
        %v798 = vrot.slane %v790, 1
        %v799 = vrot.slane %v792, 1
        %v800 = vsel %vm447, %v798, %v799
        %v801 = vrot.slane %v791, 1
        %v802 = vrot.slane %v793, 1
        %v803 = vsel %vm447, %v801, %v802
        %804 = vrot.lane.b32.xlu0 %v800, 126
        %v805 = vpop.permute.xlu0 %804
        %806 = vrot.lane.b32.xlu0 %v803, 126
        %v807 = vpop.permute.xlu0 %806
        %v808 = vsel %vm352, %v805, %v807
        %v810 = vadd.f32 %v634, %v808
        %v811 = vstv %s206
        %v812 = vmul.f32 %v811, %v440
        %v813 = vmul.f32 %v811, %v523
        %v814 = vmul.f32 %v811, %v441
        %v815 = vmul.f32 %v811, %v524
        %v820 = vrot.slane %v812, 1
        %v821 = vrot.slane %v814, 1
        %v822 = vsel %vm447, %v820, %v821
        %v823 = vrot.slane %v813, 1
        %v824 = vrot.slane %v815, 1
        %v825 = vsel %vm447, %v823, %v824
        %826 = vrot.lane.b32.xlu0 %v822, 126
        %v827 = vpop.permute.xlu0 %826
        %828 = vrot.lane.b32.xlu0 %v825, 126
        %v829 = vpop.permute.xlu0 %828
        %v830 = vsel %vm352, %v827, %v829
        %v832 = vadd.f32 %v656, %v830
        %v833 = vstv %s215
        %v834 = vmul.f32 %v833, %v440
        %v835 = vmul.f32 %v833, %v523
        %v836 = vmul.f32 %v833, %v441
        %v837 = vmul.f32 %v833, %v524
        %v842 = vrot.slane %v834, 1
        %v843 = vrot.slane %v836, 1
        %v844 = vsel %vm447, %v842, %v843
        %v845 = vrot.slane %v835, 1
        %v846 = vrot.slane %v837, 1
        %v847 = vsel %vm447, %v845, %v846
        %848 = vrot.lane.b32.xlu0 %v844, 126
        %v849 = vpop.permute.xlu0 %848
        %850 = vrot.lane.b32.xlu0 %v847, 126
        %v851 = vpop.permute.xlu0 %850
        %v852 = vsel %vm352, %v849, %v851
        %v854 = vadd.f32 %v678, %v852
        %v855 = vstv %s224
        %v856 = vmul.f32 %v855, %v440
        %v857 = vmul.f32 %v855, %v523
        %v858 = vmul.f32 %v855, %v441
        %v859 = vmul.f32 %v855, %v524
        %v864 = vrot.slane %v856, 1
        %v865 = vrot.slane %v858, 1
        %v866 = vsel %vm447, %v864, %v865
        %v867 = vrot.slane %v857, 1
        %v868 = vrot.slane %v859, 1
        %v869 = vsel %vm447, %v867, %v868
        %870 = vrot.lane.b32.xlu0 %v866, 126
        %v871 = vpop.permute.xlu0 %870
        %872 = vrot.lane.b32.xlu0 %v869, 126
        %v873 = vpop.permute.xlu0 %872
        %v874 = vsel %vm352, %v871, %v873
        %v876 = vadd.f32 %v700, %v874
        %v877 = vld [vmem:[%s155] sm:$0xfc]
        %v878 = vld [vmem:[%s155 + $0x10] sm:$0x3]
        %v879 = vstv %s162
        %v880 = vmul.f32 %v879, %v877
        %v881 = vmul.f32 %v879, %v878
        %vm884 = vcmask 1045504
        %v885 = vrot.slane %v880, 2
        %v886 = vrot.slane %v881, 2
        %v887 = vsel %vm884, %v885, %v886
        %v889 = vadd.f32 %v722, %v887
        %v890 = vstv %s171
        %v891 = vmul.f32 %v890, %v877
        %v892 = vmul.f32 %v890, %v878
        %v895 = vrot.slane %v891, 2
        %v896 = vrot.slane %v892, 2
        %v897 = vsel %vm884, %v895, %v896
        %v899 = vadd.f32 %v744, %v897
        %v900 = vstv %s180
        %v901 = vmul.f32 %v900, %v877
        %v902 = vmul.f32 %v900, %v878
        %v905 = vrot.slane %v901, 2
        %v906 = vrot.slane %v902, 2
        %v907 = vsel %vm884, %v905, %v906
        %v909 = vadd.f32 %v766, %v907
        %v910 = vstv %s189
        %v911 = vmul.f32 %v910, %v877
        %v912 = vmul.f32 %v910, %v878
        %v915 = vrot.slane %v911, 2
        %v916 = vrot.slane %v912, 2
        %v917 = vsel %vm884, %v915, %v916
        %v919 = vadd.f32 %v788, %v917
        %v920 = vstv %s198
        %v921 = vmul.f32 %v920, %v877
        %v922 = vmul.f32 %v920, %v878
        %v925 = vrot.slane %v921, 2
        %v926 = vrot.slane %v922, 2
        %v927 = vsel %vm884, %v925, %v926
        %v929 = vadd.f32 %v810, %v927
        %v930 = vstv %s207
        %v931 = vmul.f32 %v930, %v877
        %v932 = vmul.f32 %v930, %v878
        %v935 = vrot.slane %v931, 2
        %v936 = vrot.slane %v932, 2
        %v937 = vsel %vm884, %v935, %v936
        %v939 = vadd.f32 %v832, %v937
        %v940 = vstv %s216
        %v941 = vmul.f32 %v940, %v877
        %v942 = vmul.f32 %v940, %v878
        %v945 = vrot.slane %v941, 2
        %v946 = vrot.slane %v942, 2
        %v947 = vsel %vm884, %v945, %v946
        %v949 = vadd.f32 %v854, %v947
        %v950 = vstv %s225
        %v951 = vmul.f32 %v950, %v877
        %v952 = vmul.f32 %v950, %v878
        %v955 = vrot.slane %v951, 2
        %v956 = vrot.slane %v952, 2
        %v957 = vsel %vm884, %v955, %v956
        %v959 = vadd.f32 %v876, %v957
        %v960 = vld [vmem:[%s155 + $0x8] sm:$0xfc]
        %v961 = vld [vmem:[%s155 + $0x18] sm:$0x3]
        %v962 = vstv %s163
        %v963 = vmul.f32 %v962, %v877
        %v964 = vmul.f32 %v962, %v960
        %v965 = vmul.f32 %v962, %v878
        %v966 = vmul.f32 %v962, %v961
        %v971 = vrot.slane %v963, 2
        %v972 = vrot.slane %v965, 2
        %v973 = vsel %vm884, %v971, %v972
        %v974 = vrot.slane %v964, 2
        %v975 = vrot.slane %v966, 2
        %v976 = vsel %vm884, %v974, %v975
        %977 = vrot.lane.b32.xlu0 %v973, 127
        %v978 = vpop.permute.xlu0 %977
        %979 = vrot.lane.b32.xlu0 %v976, 127
        %v980 = vpop.permute.xlu0 %979
        %v981 = vsel %vm255, %v978, %v980
        %v983 = vadd.f32 %v889, %v981
        %v984 = vstv %s172
        %v985 = vmul.f32 %v984, %v877
        %v986 = vmul.f32 %v984, %v960
        %v987 = vmul.f32 %v984, %v878
        %v988 = vmul.f32 %v984, %v961
        %v993 = vrot.slane %v985, 2
        %v994 = vrot.slane %v987, 2
        %v995 = vsel %vm884, %v993, %v994
        %v996 = vrot.slane %v986, 2
        %v997 = vrot.slane %v988, 2
        %v998 = vsel %vm884, %v996, %v997
        %999 = vrot.lane.b32.xlu0 %v995, 127
        %v1000 = vpop.permute.xlu0 %999
        %1001 = vrot.lane.b32.xlu0 %v998, 127
        %v1002 = vpop.permute.xlu0 %1001
        %v1003 = vsel %vm255, %v1000, %v1002
        %v1005 = vadd.f32 %v899, %v1003
        %v1006 = vstv %s181
        %v1007 = vmul.f32 %v1006, %v877
        %v1008 = vmul.f32 %v1006, %v960
        %v1009 = vmul.f32 %v1006, %v878
        %v1010 = vmul.f32 %v1006, %v961
        %v1015 = vrot.slane %v1007, 2
        %v1016 = vrot.slane %v1009, 2
        %v1017 = vsel %vm884, %v1015, %v1016
        %v1018 = vrot.slane %v1008, 2
        %v1019 = vrot.slane %v1010, 2
        %v1020 = vsel %vm884, %v1018, %v1019
        %1021 = vrot.lane.b32.xlu0 %v1017, 127
        %v1022 = vpop.permute.xlu0 %1021
        %1023 = vrot.lane.b32.xlu0 %v1020, 127
        %v1024 = vpop.permute.xlu0 %1023
        %v1025 = vsel %vm255, %v1022, %v1024
        %v1027 = vadd.f32 %v909, %v1025
        %v1028 = vstv %s190
        %v1029 = vmul.f32 %v1028, %v877
        %v1030 = vmul.f32 %v1028, %v960
        %v1031 = vmul.f32 %v1028, %v878
        %v1032 = vmul.f32 %v1028, %v961
        %v1037 = vrot.slane %v1029, 2
        %v1038 = vrot.slane %v1031, 2
        %v1039 = vsel %vm884, %v1037, %v1038
        %v1040 = vrot.slane %v1030, 2
        %v1041 = vrot.slane %v1032, 2
        %v1042 = vsel %vm884, %v1040, %v1041
        %1043 = vrot.lane.b32.xlu0 %v1039, 127
        %v1044 = vpop.permute.xlu0 %1043
        %1045 = vrot.lane.b32.xlu0 %v1042, 127
        %v1046 = vpop.permute.xlu0 %1045
        %v1047 = vsel %vm255, %v1044, %v1046
        %v1049 = vadd.f32 %v919, %v1047
        %v1050 = vstv %s199
        %v1051 = vmul.f32 %v1050, %v877
        %v1052 = vmul.f32 %v1050, %v960
        %v1053 = vmul.f32 %v1050, %v878
        %v1054 = vmul.f32 %v1050, %v961
        %v1059 = vrot.slane %v1051, 2
        %v1060 = vrot.slane %v1053, 2
        %v1061 = vsel %vm884, %v1059, %v1060
        %v1062 = vrot.slane %v1052, 2
        %v1063 = vrot.slane %v1054, 2
        %v1064 = vsel %vm884, %v1062, %v1063
        %1065 = vrot.lane.b32.xlu0 %v1061, 127
        %v1066 = vpop.permute.xlu0 %1065
        %1067 = vrot.lane.b32.xlu0 %v1064, 127
        %v1068 = vpop.permute.xlu0 %1067
        %v1069 = vsel %vm255, %v1066, %v1068
        %v1071 = vadd.f32 %v929, %v1069
        %v1072 = vstv %s208
        %v1073 = vmul.f32 %v1072, %v877
        %v1074 = vmul.f32 %v1072, %v960
        %v1075 = vmul.f32 %v1072, %v878
        %v1076 = vmul.f32 %v1072, %v961
        %v1081 = vrot.slane %v1073, 2
        %v1082 = vrot.slane %v1075, 2
        %v1083 = vsel %vm884, %v1081, %v1082
        %v1084 = vrot.slane %v1074, 2
        %v1085 = vrot.slane %v1076, 2
        %v1086 = vsel %vm884, %v1084, %v1085
        %1087 = vrot.lane.b32.xlu0 %v1083, 127
        %v1088 = vpop.permute.xlu0 %1087
        %1089 = vrot.lane.b32.xlu0 %v1086, 127
        %v1090 = vpop.permute.xlu0 %1089
        %v1091 = vsel %vm255, %v1088, %v1090
        %v1093 = vadd.f32 %v939, %v1091
        %v1094 = vstv %s217
        %v1095 = vmul.f32 %v1094, %v877
        %v1096 = vmul.f32 %v1094, %v960
        %v1097 = vmul.f32 %v1094, %v878
        %v1098 = vmul.f32 %v1094, %v961
        %v1103 = vrot.slane %v1095, 2
        %v1104 = vrot.slane %v1097, 2
        %v1105 = vsel %vm884, %v1103, %v1104
        %v1106 = vrot.slane %v1096, 2
        %v1107 = vrot.slane %v1098, 2
        %v1108 = vsel %vm884, %v1106, %v1107
        %1109 = vrot.lane.b32.xlu0 %v1105, 127
        %v1110 = vpop.permute.xlu0 %1109
        %1111 = vrot.lane.b32.xlu0 %v1108, 127
        %v1112 = vpop.permute.xlu0 %1111
        %v1113 = vsel %vm255, %v1110, %v1112
        %v1115 = vadd.f32 %v949, %v1113
        %v1116 = vstv %s226
        %v1117 = vmul.f32 %v1116, %v877
        %v1118 = vmul.f32 %v1116, %v960
        %v1119 = vmul.f32 %v1116, %v878
        %v1120 = vmul.f32 %v1116, %v961
        %v1125 = vrot.slane %v1117, 2
        %v1126 = vrot.slane %v1119, 2
        %v1127 = vsel %vm884, %v1125, %v1126
        %v1128 = vrot.slane %v1118, 2
        %v1129 = vrot.slane %v1120, 2
        %v1130 = vsel %vm884, %v1128, %v1129
        %1131 = vrot.lane.b32.xlu0 %v1127, 127
        %v1132 = vpop.permute.xlu0 %1131
        %1133 = vrot.lane.b32.xlu0 %v1130, 127
        %v1134 = vpop.permute.xlu0 %1133
        %v1135 = vsel %vm255, %v1132, %v1134
        %v1137 = vadd.f32 %v959, %v1135
        %v1138 = vstv %s164
        %v1139 = vmul.f32 %v1138, %v877
        %v1140 = vmul.f32 %v1138, %v960
        %v1141 = vmul.f32 %v1138, %v878
        %v1142 = vmul.f32 %v1138, %v961
        %v1147 = vrot.slane %v1139, 2
        %v1148 = vrot.slane %v1141, 2
        %v1149 = vsel %vm884, %v1147, %v1148
        %v1150 = vrot.slane %v1140, 2
        %v1151 = vrot.slane %v1142, 2
        %v1152 = vsel %vm884, %v1150, %v1151
        %1153 = vrot.lane.b32.xlu0 %v1149, 126
        %v1154 = vpop.permute.xlu0 %1153
        %1155 = vrot.lane.b32.xlu0 %v1152, 126
        %v1156 = vpop.permute.xlu0 %1155
        %v1157 = vsel %vm352, %v1154, %v1156
        %v1159 = vadd.f32 %v983, %v1157
        %v1160 = vstv %s173
        %v1161 = vmul.f32 %v1160, %v877
        %v1162 = vmul.f32 %v1160, %v960
        %v1163 = vmul.f32 %v1160, %v878
        %v1164 = vmul.f32 %v1160, %v961
        %v1169 = vrot.slane %v1161, 2
        %v1170 = vrot.slane %v1163, 2
        %v1171 = vsel %vm884, %v1169, %v1170
        %v1172 = vrot.slane %v1162, 2
        %v1173 = vrot.slane %v1164, 2
        %v1174 = vsel %vm884, %v1172, %v1173
        %1175 = vrot.lane.b32.xlu0 %v1171, 126
        %v1176 = vpop.permute.xlu0 %1175
        %1177 = vrot.lane.b32.xlu0 %v1174, 126
        %v1178 = vpop.permute.xlu0 %1177
        %v1179 = vsel %vm352, %v1176, %v1178
        %v1181 = vadd.f32 %v1005, %v1179
        %v1182 = vstv %s182
        %v1183 = vmul.f32 %v1182, %v877
        %v1184 = vmul.f32 %v1182, %v960
        %v1185 = vmul.f32 %v1182, %v878
        %v1186 = vmul.f32 %v1182, %v961
        %v1191 = vrot.slane %v1183, 2
        %v1192 = vrot.slane %v1185, 2
        %v1193 = vsel %vm884, %v1191, %v1192
        %v1194 = vrot.slane %v1184, 2
        %v1195 = vrot.slane %v1186, 2
        %v1196 = vsel %vm884, %v1194, %v1195
        %1197 = vrot.lane.b32.xlu0 %v1193, 126
        %v1198 = vpop.permute.xlu0 %1197
        %1199 = vrot.lane.b32.xlu0 %v1196, 126
        %v1200 = vpop.permute.xlu0 %1199
        %v1201 = vsel %vm352, %v1198, %v1200
        %v1203 = vadd.f32 %v1027, %v1201
        %v1204 = vstv %s191
        %v1205 = vmul.f32 %v1204, %v877
        %v1206 = vmul.f32 %v1204, %v960
        %v1207 = vmul.f32 %v1204, %v878
        %v1208 = vmul.f32 %v1204, %v961
        %v1213 = vrot.slane %v1205, 2
        %v1214 = vrot.slane %v1207, 2
        %v1215 = vsel %vm884, %v1213, %v1214
        %v1216 = vrot.slane %v1206, 2
        %v1217 = vrot.slane %v1208, 2
        %v1218 = vsel %vm884, %v1216, %v1217
        %1219 = vrot.lane.b32.xlu0 %v1215, 126
        %v1220 = vpop.permute.xlu0 %1219
        %1221 = vrot.lane.b32.xlu0 %v1218, 126
        %v1222 = vpop.permute.xlu0 %1221
        %v1223 = vsel %vm352, %v1220, %v1222
        %v1225 = vadd.f32 %v1049, %v1223
        %v1226 = vstv %s200
        %v1227 = vmul.f32 %v1226, %v877
        %v1228 = vmul.f32 %v1226, %v960
        %v1229 = vmul.f32 %v1226, %v878
        %v1230 = vmul.f32 %v1226, %v961
        %v1235 = vrot.slane %v1227, 2
        %v1236 = vrot.slane %v1229, 2
        %v1237 = vsel %vm884, %v1235, %v1236
        %v1238 = vrot.slane %v1228, 2
        %v1239 = vrot.slane %v1230, 2
        %v1240 = vsel %vm884, %v1238, %v1239
        %1241 = vrot.lane.b32.xlu0 %v1237, 126
        %v1242 = vpop.permute.xlu0 %1241
        %1243 = vrot.lane.b32.xlu0 %v1240, 126
        %v1244 = vpop.permute.xlu0 %1243
        %v1245 = vsel %vm352, %v1242, %v1244
        %v1247 = vadd.f32 %v1071, %v1245
        %v1248 = vstv %s209
        %v1249 = vmul.f32 %v1248, %v877
        %v1250 = vmul.f32 %v1248, %v960
        %v1251 = vmul.f32 %v1248, %v878
        %v1252 = vmul.f32 %v1248, %v961
        %v1257 = vrot.slane %v1249, 2
        %v1258 = vrot.slane %v1251, 2
        %v1259 = vsel %vm884, %v1257, %v1258
        %v1260 = vrot.slane %v1250, 2
        %v1261 = vrot.slane %v1252, 2
        %v1262 = vsel %vm884, %v1260, %v1261
        %1263 = vrot.lane.b32.xlu0 %v1259, 126
        %v1264 = vpop.permute.xlu0 %1263
        %1265 = vrot.lane.b32.xlu0 %v1262, 126
        %v1266 = vpop.permute.xlu0 %1265
        %v1267 = vsel %vm352, %v1264, %v1266
        %v1269 = vadd.f32 %v1093, %v1267
        %v1270 = vstv %s218
        %v1271 = vmul.f32 %v1270, %v877
        %v1272 = vmul.f32 %v1270, %v960
        %v1273 = vmul.f32 %v1270, %v878
        %v1274 = vmul.f32 %v1270, %v961
        %v1279 = vrot.slane %v1271, 2
        %v1280 = vrot.slane %v1273, 2
        %v1281 = vsel %vm884, %v1279, %v1280
        %v1282 = vrot.slane %v1272, 2
        %v1283 = vrot.slane %v1274, 2
        %v1284 = vsel %vm884, %v1282, %v1283
        %1285 = vrot.lane.b32.xlu0 %v1281, 126
        %v1286 = vpop.permute.xlu0 %1285
        %1287 = vrot.lane.b32.xlu0 %v1284, 126
        %v1288 = vpop.permute.xlu0 %1287
        %v1289 = vsel %vm352, %v1286, %v1288
        %v1291 = vadd.f32 %v1115, %v1289
        %v1292 = vstv %s227
        %v1293 = vmul.f32 %v1292, %v877
        %v1294 = vmul.f32 %v1292, %v960
        %v1295 = vmul.f32 %v1292, %v878
        %v1296 = vmul.f32 %v1292, %v961
        %v1301 = vrot.slane %v1293, 2
        %v1302 = vrot.slane %v1295, 2
        %v1303 = vsel %vm884, %v1301, %v1302
        %v1304 = vrot.slane %v1294, 2
        %v1305 = vrot.slane %v1296, 2
        %v1306 = vsel %vm884, %v1304, %v1305
        %1307 = vrot.lane.b32.xlu0 %v1303, 126
        %v1308 = vpop.permute.xlu0 %1307
        %1309 = vrot.lane.b32.xlu0 %v1306, 126
        %v1310 = vpop.permute.xlu0 %1309
        %v1311 = vsel %vm352, %v1308, %v1310
        %v1313 = vadd.f32 %v1137, %v1311
        %v1314 = vmax.f32 %v1159, 0.0
        %v1315 = vmax.f32 %v1181, 0.0
        %v1316 = vmax.f32 %v1203, 0.0
        %v1317 = vmax.f32 %v1225, 0.0
        %v1318 = vmax.f32 %v1247, 0.0
        %v1319 = vmax.f32 %v1291, 0.0
        %v1320 = vadd.f32 %v1318, %v1319
        %v1321 = vmax.f32 %v1269, 0.0
        %v1322 = vmax.f32 %v1313, 0.0
        %v1323 = vadd.f32 %v1321, %v1322
        %v1324 = vlaneseq
        %v1325 = vand.u32 %v1324, 127
        %v1326 = vlaneseq
        %v1327 = vshrl.u32 %v1326, 7
        %vm1328 = vcmp.eq.s32.totalorder %v1325, 5
        %vm1329 = vcmp.eq.s32.totalorder %v1325, 4
        %vm1330 = vcmp.eq.s32.totalorder %v1327, 5
        %vm1331 = vcmp.eq.s32.totalorder %v1327, 4
        %1332 = vrot.lane.b32.xlu0 %v1320, 127
        %v1333 = vpop.permute.xlu0 %1332
        %v1334 = vsel %vm1329, 0.0, %v1333
        %v1335 = vsel %vm1328, %v1320, %v1334
        %v1336 = vmul.f32 %v1320, %v1335
        %vm1337 = vcmp.gt.f32.partialorder %v1336, 0.02
        %1338 = vrot.lane.b32.xlu0 %v1323, 127
        %v1339 = vpop.permute.xlu0 %1338
        %v1340 = vsel %vm1329, 0.0, %v1339
        %v1341 = vsel %vm1328, %v1323, %v1340
        %v1342 = vmul.f32 %v1323, %v1341
        %vm1343 = vcmp.gt.f32.partialorder %v1342, 0.02
        %v1344 = vrot.slane %v1320, 1
        %v1345 = vsel %vm1331, 0.0, %v1344
        %v1346 = vsel %vm1330, %v1320, %v1345
        %v1347 = vmul.f32 %v1320, %v1346
        %vm1348 = vcmp.gt.f32.partialorder %v1347, 0.02
        %v1349 = vrot.slane %v1323, 1
        %v1350 = vsel %vm1331, 0.0, %v1349
        %v1351 = vsel %vm1330, %v1323, %v1350
        %v1352 = vmul.f32 %v1323, %v1351
        %vm1353 = vcmp.gt.f32.partialorder %v1352, 0.02
        %v1354 = vrot.slane %v1314, 1
        %v1355 = vsel %vm1331, 0.0, %v1354
        %v1356 = vsel %vm1330, %v1314, %v1355
        %1357 = vrot.lane.b32.xlu0 %v1316, 127
        %v1358 = vpop.permute.xlu0 %1357
        %v1359 = vsel %vm1329, 0.0, %v1358
        %v1360 = vsel %vm1328, %v1316, %v1359
        %v1361 = vmul.f32 %v1356, %v1314
        %v1362 = vmul.f32 %v1360, %v1316
        %vm1363 = vcmp.gt.f32.partialorder %v1361, 0.02
        %v1364 = vsel %vm1363, 0.0, %v1362
        %1365 = vst [vmem:[%s150] sm:$0xff] %v1364
        %vm1366 = vcmp.gt.f32.partialorder %v1362, 0.02
        %v1367 = vsel %vm1366, 0.0, %v1361
        %s1368 = scalar_lea.vmem %s150, 16 [#allocation5]
        %1369 = vst [vmem:[%s1368] sm:$0xff] %v1367
        %1370 = vrot.lane.b32.xlu0 %v1356, 127
        %v1371 = vpop.permute.xlu0 %1370
        %v1372 = vsel %vm1329, 0.0, %v1371
        %v1373 = vsel %vm1328, %v1356, %v1372
        %v1374 = vmul.f32 %v1373, %v1314
        %v1375 = vsel %vm1337, 0.0, %v1374
        %s1376 = scalar_lea.vmem %s150, 8 [#allocation5]
        %1377 = vst [vmem:[%s1376] sm:$0xff] %v1375
        %1378 = vrot.lane.b32.xlu0 %v1314, 127
        %v1379 = vpop.permute.xlu0 %1378
        %v1380 = vsel %vm1329, 0.0, %v1379
        %v1381 = vsel %vm1328, %v1314, %v1380
        %v1382 = vmul.f32 %v1356, %v1381
        %v1383 = vsel %vm1343, 0.0, %v1382
        %s1384 = scalar_lea.vmem %s150, 24 [#allocation5]
        %1385 = vst [vmem:[%s1384] sm:$0xff] %v1383
        %v1386 = vrot.slane %v1360, 1
        %v1387 = vsel %vm1331, 0.0, %v1386
        %v1388 = vsel %vm1330, %v1360, %v1387
        %v1389 = vmul.f32 %v1388, %v1316
        %v1390 = vsel %vm1348, 0.0, %v1389
        %s1391 = scalar_lea.vmem %s150, 32 [#allocation5]
        %1392 = vst [vmem:[%s1391] sm:$0xff] %v1390
        %v1393 = vrot.slane %v1316, 1
        %v1394 = vsel %vm1331, 0.0, %v1393
        %v1395 = vsel %vm1330, %v1316, %v1394
        %v1396 = vmul.f32 %v1395, %v1360
        %v1397 = vsel %vm1353, 0.0, %v1396
        %s1398 = scalar_lea.vmem %s150, 40 [#allocation5]
        %1399 = vst [vmem:[%s1398] sm:$0xff] %v1397
        %v1400 = vrot.slane %v1315, 1
        %v1401 = vsel %vm1331, 0.0, %v1400
        %v1402 = vsel %vm1330, %v1315, %v1401
        %1403 = vrot.lane.b32.xlu0 %v1317, 127
        %v1404 = vpop.permute.xlu0 %1403
        %v1405 = vsel %vm1329, 0.0, %v1404
        %v1406 = vsel %vm1328, %v1317, %v1405
        %v1407 = vmul.f32 %v1402, %v1315
        %v1408 = vmul.f32 %v1406, %v1317
        %vm1409 = vcmp.gt.f32.partialorder %v1407, 0.02
        %v1410 = vsel %vm1409, 0.0, %v1408
        %s1411 = scalar_lea.vmem %s150, 48 [#allocation5]
        %1412 = vst [vmem:[%s1411] sm:$0xff] %v1410
        %vm1413 = vcmp.gt.f32.partialorder %v1408, 0.02
        %v1414 = vsel %vm1413, 0.0, %v1407
        %s1415 = scalar_lea.vmem %s150, 64 [#allocation5]
        %1416 = vst [vmem:[%s1415] sm:$0xff] %v1414
        %1417 = vrot.lane.b32.xlu0 %v1402, 127
        %v1418 = vpop.permute.xlu0 %1417
        %v1419 = vsel %vm1329, 0.0, %v1418
        %v1420 = vsel %vm1328, %v1402, %v1419
        %v1421 = vmul.f32 %v1420, %v1315
        %v1422 = vsel %vm1337, 0.0, %v1421
        %s1423 = scalar_lea.vmem %s150, 56 [#allocation5]
        %1424 = vst [vmem:[%s1423] sm:$0xff] %v1422
        %1425 = vrot.lane.b32.xlu0 %v1315, 127
        %v1426 = vpop.permute.xlu0 %1425
        %v1427 = vsel %vm1329, 0.0, %v1426
        %v1428 = vsel %vm1328, %v1315, %v1427
        %v1429 = vmul.f32 %v1402, %v1428
        %v1430 = vsel %vm1343, 0.0, %v1429
        %s1431 = scalar_lea.vmem %s150, 72 [#allocation5]
        %1432 = vst [vmem:[%s1431] sm:$0xff] %v1430
        %v1433 = vrot.slane %v1406, 1
        %v1434 = vsel %vm1331, 0.0, %v1433
        %v1435 = vsel %vm1330, %v1406, %v1434
        %v1436 = vmul.f32 %v1435, %v1317
        %v1437 = vsel %vm1348, 0.0, %v1436
        %s1438 = scalar_lea.vmem %s150, 80 [#allocation5]
        %1439 = vst [vmem:[%s1438] sm:$0xff] %v1437
        %v1440 = vrot.slane %v1317, 1
        %v1441 = vsel %vm1331, 0.0, %v1440
        %v1442 = vsel %vm1330, %v1317, %v1441
        %v1443 = vmul.f32 %v1442, %v1406
        %v1444 = vsel %vm1353, 0.0, %v1443
        %s1445 = scalar_lea.vmem %s150, 88 [#allocation5]
        %1446 = vst [vmem:[%s1445] sm:$0xff] %v1444
        %s1447 = sand.u32 %s72, 1
        %s1448 = scalar_lea.sflag [#allocation3], %s1447
        %s1449 = sand.u32 %s72, 1
        %s1450 = smul.addr %s1449, 96
        %s1451 = scalar_lea.vmem [#allocation5], %s1450
        // Predicated region
        $region33: #{tpu_custom_call.1} parent=27 // pred_check
          %p1452 = pneg %p82
        $region34: #{tpu_custom_call.1} parent=27 // pred_check_branch
          %1454 = sbr.rel (%p1452) target = $region36
        $region35: #{tpu_custom_call.1} parent=27 // pred_region
          %s1456 = ssub.s32 1536, 1536
          %1457 = vsyncadd %s1448, %s1456
          %s1458 = smul.addr %s17, 12
          %s1459 = smul.addr %s1458, 128
          %s1460 = scalar_lea.hbm %s2, %s1459
          %s1461 = sshll.u32 %s1451, 4
          %s1462 = int_to_ptr.vmem [resolvable:$true] %s1461
          %1467 = dma.vmem_to_hbm [thread:$0]  %s1462, 1536, %s1460, %s1448, 128, 128, 8
        $region36: #{tpu_custom_call.1} parent=27 // pred_fallthru
          _
      $region28: #{tpu_custom_call.1} parent=5 // pred_fallthru
        _
      %p1468 = scmp.le.s32.totalorder 2, %s12
      // Predicated region
      $region37: #{tpu_custom_call.1} parent=5 // pred_check
        %p1469 = pneg %p1468
      $region38: #{tpu_custom_call.1} parent=5 // pred_check_branch
        %1471 = sbr.rel (%p1469) target = $region40
      $region39: #{tpu_custom_call.1} parent=5 // pred_region
        %s1472 = ssub.s32 %s12, 2
        // Predicated region
        $region41: #{tpu_custom_call.1} parent=39 // pred_check
          %p1473 = pneg %p88
        $region42: #{tpu_custom_call.1} parent=39 // pred_check_branch
          %1475 = sbr.rel (%p1473) target = $region44
        $region43: #{tpu_custom_call.1} parent=39 // pred_region
          %s1476 = sand.u32 %s73, 1
          %s1477 = scalar_lea.sflag [#allocation3], %s1476
          %s1478 = sand.u32 %s73, 1
          %s1479 = smul.addr %s1478, 96
          %s1480 = scalar_lea.vmem [#allocation5], %s1479
          %1481 = dma.done %s1477, 1536
        $region44: #{tpu_custom_call.1} parent=39 // pred_fallthru
          _
      $region40: #{tpu_custom_call.1} parent=5 // pred_fallthru
        _
    $region6: #{tpu_custom_call.1} parent=1 // loop_footer
      %s16 = sadd.s32 1, %s12
    $region7: #{tpu_custom_call.1} parent=1 // loop_footer_branch
      %11 = sbr.rel target = $region3
    $region8: #{tpu_custom_call.1} parent=1 // loop_exit
      _
    %1482 = vsyncpa [#allocation3], 1
    %s1483 = scalar_lea.sflag [#allocation3], 1
    %1484 = vsyncpa %s1483, 1
    %1485 = vsyncpa [#allocation4], 1
    %s1486 = scalar_lea.sflag [#allocation4], 1
    %1487 = vsyncpa %s1486, 1

</llo_original>
